<compile_context>
chip_gen: v6e
topology: v6e:2x2x1
jax: 0.10.0
libtpu: 0.0.40
codegen_flags: <defaults>
</compile_context>

<pallas_src>
import functools

import jax
import jax.numpy as jnp
from jax.experimental import pallas as pl
from jax.experimental.pallas import tpu as pltpu


# Matmul operand dtype.  f32 keeps the numeric sanity check strict; on v6e/v7x
# set jnp.bfloat16 for the MXU fast path (elementwise math stays f32 either
# way, which v5e's VPU/EUP require).  Tolerances in __main__ adapt.
_MATMUL_DTYPE = jnp.float32


def _conv_offsets(wp):
    """Flat-index offsets of the 3x3 taps on the per-image padded grid (row stride wp)."""
    return [(di - 1) * wp + (dj - 1) for di in range(3) for dj in range(3)]


def _mm(a, b):
    return jnp.dot(a.astype(_MATMUL_DTYPE), b.astype(_MATMUL_DTYPE),
                   preferred_element_type=jnp.float32)


def _mm_nt(a, b):
    """a[m, L] x b[n, L] -> a @ b.T (contract over the lane axis, no transpose copy)."""
    return jax.lax.dot_general(
        a.astype(_MATMUL_DTYPE), b.astype(_MATMUL_DTYPE),
        dimension_numbers=(((1,), (1,)), ((), ())),
        preferred_element_type=jnp.float32)


def _roll_lanes(v, shift, mp_pad):
    """jnp.roll semantics on the lane axis via the XLU: out[:, p] = v[:, (p - shift) % mp_pad]."""
    s = shift % mp_pad
    return v if s == 0 else pltpu.roll(v, shift=s, axis=1)


# ----------------------------------------------------------------------------
# Fused Pallas kernels: conv3x3 -> ReLU -> conv3x3 -> MSE (+ parameter grads)
# ----------------------------------------------------------------------------
def _forward_pass(x_ref, y_ref, m_ref, w1_ref, b1_ref, w2_ref, b2_ref,
                  xp_ref, hp_ref, *, n, c, h, w, hidden, cout):
    wp = w + 2
    mp_pad = x_ref.shape[1]
    offs = _conv_offsets(wp)
    inv_size = 1.0 / float(n * cout * h * w)

    mask = m_ref[...]                                        # [1, mp_pad]
    x = x_ref[...]                                           # [c, mp_pad]

    # In-kernel im2col: 9 XLU lane-rolls build the stacked patch matrix once,
    # then ONE MXU matmul per conv layer.  Wrapped lanes only land on
    # pad-grid / tail positions, which the mask zeroes downstream.
    for t, k in enumerate(offs):
        xp_ref[t * c:(t + 1) * c, :] = _roll_lanes(x, -k, mp_pad)
    a1 = _mm(w1_ref[...], xp_ref[...]) + b1_ref[...]         # [hidden, mp_pad]
    h1 = jnp.maximum(a1, 0.0) * mask                         # zero at pad/tail positions

    for t, k in enumerate(offs):
        hp_ref[t * hidden:(t + 1) * hidden, :] = _roll_lanes(h1, -k, mp_pad)
    a2 = _mm(w2_ref[...], hp_ref[...]) + b2_ref[...]         # [cout, mp_pad]

    diff = (a2 - y_ref[...]) * mask
    loss = jnp.sum(diff * diff) * inv_size                   # 1/size folded in
    return a1, diff, mask, loss


def _loss_kernel(x_ref, y_ref, m_ref, w1_ref, b1_ref, w2_ref, b2_ref,
                 loss_ref, xp_ref, hp_ref, *, n, c, h, w, hidden, cout):
    _, _, _, loss = _forward_pass(
        x_ref, y_ref, m_ref, w1_ref, b1_ref, w2_ref, b2_ref, xp_ref, hp_ref,
        n=n, c=c, h=h, w=w, hidden=hidden, cout=cout)
    loss_ref[0, 0] = loss


def _loss_grad_kernel(x_ref, y_ref, m_ref, w1_ref, b1_ref, w2_ref, b2_ref,
                      w2t_ref, loss_ref, dw1_ref, db1_ref, dw2_ref, db2_ref,
                      xp_ref, hp_ref, *, n, c, h, w, hidden, cout):
    wp = w + 2
    mp_pad = x_ref.shape[1]
    offs = _conv_offsets(wp)
    inv_size = 1.0 / float(n * cout * h * w)

    a1, diff, mask, loss = _forward_pass(
        x_ref, y_ref, m_ref, w1_ref, b1_ref, w2_ref, b2_ref, xp_ref, hp_ref,
        n=n, c=c, h=h, w=w, hidden=hidden, cout=cout)
    loss_ref[0, 0] = loss

    # d(loss)/d(conv2 pre-activation); already zero at pad-grid / tail positions.
    da2 = diff * (2.0 * inv_size)                            # [cout, mp_pad]
    db2_ref[...] = jnp.sum(da2, axis=1, keepdims=True)
    # ONE dW2 matmul against the stacked h1 patches; single lane-dense store.
    dw2_ref[...] = _mm_nt(da2, hp_ref[...])                  # [cout, 9*hidden]

    # dh1: ONE stacked matmul, then 9 XLU rolls accumulated from registers
    # (no store->load round trip through a halo scratch).
    g = _mm(w2t_ref[...], da2)                               # [9*hidden, mp_pad]
    dh1 = jnp.zeros((hidden, mp_pad), jnp.float32)
    for t, k in enumerate(offs):
        dh1 = dh1 + _roll_lanes(g[t * hidden:(t + 1) * hidden, :], k, mp_pad)

    da1 = jnp.where(a1 > 0.0, dh1 * mask, 0.0)               # [hidden, mp_pad]
    db1_ref[...] = jnp.sum(da1, axis=1, keepdims=True)
    # ONE dW1 matmul against the stacked x patches; single lane-dense store.
    dw1_ref[...] = _mm_nt(da1, xp_ref[...])                  # [hidden, 9*c]


# ----------------------------------------------------------------------------
# JAX-side layout glue (one pad/transpose per array, hoisted out of hot loops)
# ----------------------------------------------------------------------------
def _flatten_padded(img, mp_pad):
    """[N, C, H, W] -> [C, mp_pad] channel-major flattened padded grid (lane-aligned tail)."""
    n, c, h, w = img.shape
    p = jnp.pad(img, ((0, 0), (0, 0), (1, 1), (1, 1)))
    flat = p.transpose(1, 0, 2, 3).reshape(c, n * (h + 2) * (w + 2))
    return jnp.pad(flat, ((0, 0), (0, mp_pad - flat.shape[1])))


def _interior_mask(n, h, w, mp_pad):
    m = jnp.zeros((h + 2, w + 2), jnp.float32).at[1:h + 1, 1:w + 1].set(1.0)
    flat = jnp.tile(m.reshape(-1), n)
    flat = jnp.pad(flat, (0, mp_pad - flat.shape[0]))
    return flat.reshape(1, mp_pad)


def _prep_inputs(x, y):
    n, _, h, w = x.shape
    mp = n * (h + 2) * (w + 2)
    mp_pad = ((mp + 127) // 128) * 128           # lane-aligned flattened length
    xe = _flatten_padded(x, mp_pad)
    yp = _flatten_padded(y, mp_pad)
    mask = _interior_mask(n, h, w, mp_pad)
    return xe, yp, mask


def _prep_params(params):
    w1, b1, w2, b2 = params
    hidden, c = w1.shape[0], w1.shape[1]
    cout = w2.shape[0]
    w1m = jnp.transpose(w1, (0, 2, 3, 1)).reshape(hidden, 9 * c)       # [hidden, 9*c]
    w2m = jnp.transpose(w2, (0, 2, 3, 1)).reshape(cout, 9 * hidden)    # [cout, 9*hidden]
    w2t = jnp.transpose(w2, (2, 3, 1, 0)).reshape(9 * hidden, cout)    # [9*hidden, cout]
    return w1m, b1.reshape(hidden, 1), w2m, b2.reshape(cout, 1), w2t


def _vmem_limit_bytes(c, hidden, cout, mp_pad):
    """Scoped-VMEM budget: whole-array blocks + patch scratches + value headroom."""
    work = 4 * mp_pad * (9 * c + 9 * hidden          # patch scratches
                         + 2 * (c + cout + 1)        # x / y / mask (double-buffered)
                         + 9 * hidden                # stacked dh1 matmul result
                         + 4 * hidden + 3 * cout)    # a1/h1/dh1/da1, a2/diff/da2
    return int(min(max(2 * work, 16 << 20), 64 << 20))   # cap at v7x physical VMEM


# ----------------------------------------------------------------------------
# Fused kernel entry points (inputs already laid out)
# ----------------------------------------------------------------------------
def _task_loss_prepped(params, xe, yp, mask, n, h, w):
    c = xe.shape[0]
    hidden = params[0].shape[0]
    cout = params[2].shape[0]
    mp_pad = xe.shape[1]
    w1m, b1c, w2m, b2c, _ = _prep_params(params)
    kern = functools.partial(_loss_kernel, n=n, c=c, h=h, w=w,
                             hidden=hidden, cout=cout)
    vmem = pl.BlockSpec(memory_space=pltpu.MemorySpace.VMEM)
    loss = pl.pallas_call(
        kern,
        out_shape=jax.ShapeDtypeStruct((1, 1), jnp.float32),
        in_specs=[vmem] * 7,
        out_specs=pl.BlockSpec(memory_space=pltpu.MemorySpace.SMEM),
        scratch_shapes=[pltpu.VMEM((9 * c, mp_pad), jnp.float32),
                        pltpu.VMEM((9 * hidden, mp_pad), jnp.float32)],
        compiler_params=pltpu.CompilerParams(
            vmem_limit_bytes=_vmem_limit_bytes(c, hidden, cout, mp_pad)),
    )(xe, yp, mask, w1m, b1c, w2m, b2c)
    return loss[0, 0]


def _task_loss_and_grads_prepped(params, xe, yp, mask, n, h, w):
    c = xe.shape[0]
    hidden = params[0].shape[0]
    cout = params[2].shape[0]
    mp_pad = xe.shape[1]
    w1m, b1c, w2m, b2c, w2t = _prep_params(params)
    kern = functools.partial(_loss_grad_kernel, n=n, c=c, h=h, w=w,
                             hidden=hidden, cout=cout)
    vmem = pl.BlockSpec(memory_space=pltpu.MemorySpace.VMEM)
    loss, dw1m, db1, dw2m, db2 = pl.pallas_call(
        kern,
        out_shape=(
            jax.ShapeDtypeStruct((1, 1), jnp.float32),
            jax.ShapeDtypeStruct((hidden, 9 * c), jnp.float32),
            jax.ShapeDtypeStruct((hidden, 1), jnp.float32),
            jax.ShapeDtypeStruct((cout, 9 * hidden), jnp.float32),
            jax.ShapeDtypeStruct((cout, 1), jnp.float32),
        ),
        in_specs=[vmem] * 8,
        out_specs=(
            pl.BlockSpec(memory_space=pltpu.MemorySpace.SMEM),
            vmem, vmem, vmem, vmem,
        ),
        scratch_shapes=[pltpu.VMEM((9 * c, mp_pad), jnp.float32),
                        pltpu.VMEM((9 * hidden, mp_pad), jnp.float32)],
        compiler_params=pltpu.CompilerParams(
            vmem_limit_bytes=_vmem_limit_bytes(c, hidden, cout, mp_pad)),
    )(xe, yp, mask, w1m, b1c, w2m, b2c, w2t)
    dw1 = dw1m.reshape(hidden, 3, 3, c).transpose(0, 3, 1, 2)
    dw2 = dw2m.reshape(cout, 3, 3, hidden).transpose(0, 3, 1, 2)
    return loss[0, 0], (dw1, db1.reshape(hidden), dw2, db2.reshape(cout))


def task_loss(params, x, y):
    """MSE(conv2(relu(conv1(x))), y) as ONE fused Pallas kernel (forward only)."""
    n, _, h, w = x.shape
    xe, yp, mask = _prep_inputs(x, y)
    return _task_loss_prepped(params, xe, yp, mask, n, h, w)


def task_loss_and_grads(params, x, y):
    """Fused forward + backward: loss and all parameter grads in ONE pallas_call."""
    n, _, h, w = x.shape
    xe, yp, mask = _prep_inputs(x, y)
    return _task_loss_and_grads_prepped(params, xe, yp, mask, n, h, w)


# ----------------------------------------------------------------------------
# Adam (matches torch.optim.Adam defaults: betas=(0.9, 0.999), eps=1e-8)
# ----------------------------------------------------------------------------
def adam_init(params):
    z = jax.tree_util.tree_map(jnp.zeros_like, params)
    return (z, jax.tree_util.tree_map(jnp.zeros_like, params),
            jnp.zeros((), jnp.float32))


def adam_step(params, grads, state, lr, b1=0.9, b2=0.999, eps=1e-8):
    m, v, t = state
    t = t + 1.0
    m = jax.tree_util.tree_map(lambda mi, gi: b1 * mi + (1.0 - b1) * gi, m, grads)
    v = jax.tree_util.tree_map(lambda vi, gi: b2 * vi + (1.0 - b2) * gi * gi, v, grads)
    bc1 = 1.0 - jnp.power(b1, t)
    bc2 = 1.0 - jnp.power(b2, t)
    new_params = jax.tree_util.tree_map(
        lambda p, mi, vi: p - lr * (mi / bc1) / (jnp.sqrt(vi / bc2) + eps),
        params, m, v)
    return new_params, (m, v, t)


# ----------------------------------------------------------------------------
# Meta.forward (Reptile meta-training step) -- semantics of the torch code,
# with tasks / inner updates as lax.scan under jit (kernels compiled once).
# ----------------------------------------------------------------------------
@functools.partial(jax.jit, static_argnames=("update_step",))
def _meta_forward(params, x_spt_all, y_spt_all, x_qry_all, y_qry_all,
                  update_lr, *, update_step):
    task_num = x_spt_all.shape[0]
    n_s, _, h, w = x_spt_all.shape[1:]
    n_q = x_qry_all.shape[1]

    def per_task(carry, task):
        x_spt, y_spt, x_qry, y_qry = task
        # Layout work (pad + flatten + mask) hoisted out of the inner update
        # loop: done ONCE per task and reused by every fused kernel call.
        spt = _prep_inputs(x_spt, y_spt)
        qry = _prep_inputs(x_qry, y_qry)

        fast = params
        opt_state = adam_init(fast)

        # first inner Adam step on the support set (fused Pallas fwd+bwd)
        _l0, grads = _task_loss_and_grads_prepped(fast, *spt, n_s, h, w)
        fast, opt_state = adam_step(fast, grads, opt_state, update_lr)

        c0 = _task_loss_prepped(params, *spt, n_s, h, w)   # meta params on support
        c1 = _task_loss_prepped(fast, *qry, n_q, h, w)     # fast weights on query

        def inner(inner_carry, _):
            fw, st = inner_carry
            _lk, gk = _task_loss_and_grads_prepped(fw, *spt, n_s, h, w)
            fw, st = adam_step(fw, gk, st, update_lr)
            # evaluated on the SUPPORT set, mirroring the reference torch code
            lk = _task_loss_prepped(fw, *spt, n_s, h, w)
            return (fw, st), lk

        (fast, opt_state), lks = jax.lax.scan(
            inner, (fast, opt_state), None, length=update_step - 1)

        diff = jax.tree_util.tree_map(lambda p, f: p - f, params, fast)
        return carry, (c0, c1, lks, diff)

    _, (c0s, c1s, lkss, diffs) = jax.lax.scan(
        per_task, None, (x_spt_all, y_spt_all, x_qry_all, y_qry_all))

    # Reptile meta-update: params -= mean_over_tasks(params - fast_weights)
    new_params = jax.tree_util.tree_map(
        lambda p, d: p - jnp.mean(d, axis=0), params, diffs)

    # final eval: updated meta-net on the LAST task's support set
    final_loss = task_loss(new_params, x_spt_all[-1], y_spt_all[-1])

    corrects = jnp.concatenate([
        jnp.stack([jnp.sum(c0s), jnp.sum(c1s)]),
        jnp.sum(lkss, axis=0),
        final_loss.reshape(1),
    ])
    querysz = 1
    accs = corrects / (querysz * task_num)
    return accs, new_params


def meta_forward(params, batch_data, update_lr, update_step):
    """batch_data[i] = (x_spt, y_spt, label_spt, x_qry, y_qry, label_qry);
    labels are unused by the MSE loss path, exactly as in the torch code."""
    c, h, w = batch_data[0][0].shape[-3:]
    img = lambda a: a.reshape(-1, c, h, w)
    x_spt = jnp.stack([img(t[0]) for t in batch_data])
    y_spt = jnp.stack([img(t[1]) for t in batch_data])
    x_qry = jnp.stack([img(t[3]) for t in batch_data])
    y_qry = jnp.stack([img(t[4]) for t in batch_data])
    return _meta_forward(params, x_spt, y_spt, x_qry, y_qry,
                         jnp.float32(update_lr), update_step=update_step)


# ----------------------------------------------------------------------------
# Pure-JAX reference (conv -> relu -> conv -> MSE) for the sanity check only
# ----------------------------------------------------------------------------
def _ref_loss(params, x, y):
    w1, b1, w2, b2 = params
    dn = ("NCHW", "OIHW", "NCHW")
    hi = jax.lax.Precision.HIGHEST
    h1 = jnp.maximum(
        jax.lax.conv_general_dilated(x, w1, (1, 1), "SAME",
                                     dimension_numbers=dn, precision=hi)
        + b1.reshape(1, -1, 1, 1), 0.0)
    out = (jax.lax.conv_general_dilated(h1, w2, (1, 1), "SAME",
                                        dimension_numbers=dn, precision=hi)
           + b2.reshape(1, -1, 1, 1))
    d = out - y
    return jnp.mean(d * d)


# ----------------------------------------------------------------------------
if __name__ == "__main__":
    key = jax.random.PRNGKey(0)

    task_num = 2
    b, setsz, qsz = 1, 2, 2
    c_, H, W = 4, 16, 16
    hidden = 8
    update_lr = 0.01
    update_step = 3

    kw1, kw2, kdata = jax.random.split(key, 3)
    params = (
        0.1 * jax.random.normal(kw1, (hidden, c_, 3, 3), jnp.float32),
        jnp.zeros((hidden,), jnp.float32),
        0.1 * jax.random.normal(kw2, (c_, hidden, 3, 3), jnp.float32),
        jnp.zeros((c_,), jnp.float32),
    )

    # batch_data[i] = (x_spt, y_spt, label_spt, x_qry, y_qry, label_qry),
    # already reshaped to [-1, c, h, w] / [-1] as the torch code does inline.
    batch_data = []
    for t in range(task_num):
        kt = jax.random.fold_in(kdata, t)
        ka, kb, kc, kd = jax.random.split(kt, 4)
        x_spt = jax.random.normal(ka, (b * setsz, c_, H, W), jnp.float32)
        y_spt = jax.random.normal(kb, (b * setsz, c_, H, W), jnp.float32)
        x_qry = jax.random.normal(kc, (b * qsz, c_, H, W), jnp.float32)
        y_qry = jax.random.normal(kd, (b * qsz, c_, H, W), jnp.float32)
        lbl_spt = jnp.zeros((b * setsz,), jnp.int32)
        lbl_qry = jnp.zeros((b * qsz,), jnp.int32)
        batch_data.append((x_spt, y_spt, lbl_spt, x_qry, y_qry, lbl_qry))

    # --- numeric sanity check of the fused Pallas loss+grad kernel ----------
    if _MATMUL_DTYPE == jnp.float32:
        ltol, gtol = 2e-2, 5e-2
    else:  # bf16 MXU operands (v6e/v7x): looser tolerances
        ltol, gtol = 5e-2, 1.5e-1
    x0, y0 = batch_data[0][0], batch_data[0][1]
    l_pal, g_pal = task_loss_and_grads(params, x0, y0)
    l_ref, g_ref = jax.value_and_grad(_ref_loss)(params, x0, y0)
    l_pal, l_ref = float(l_pal), float(l_ref)
    assert abs(l_pal - l_ref) <= ltol * (abs(l_ref) + 1e-3), (l_pal, l_ref)
    for gp, gr in zip(g_pal, g_ref):
        err = float(jnp.linalg.norm(gp - gr))
        scale = float(jnp.linalg.norm(gr)) + 1e-4
        assert err <= gtol * scale, (err, scale)

    # --- one full Reptile meta step (scan-compiled, fused Pallas kernels) ---
    accs, new_params = meta_forward(params, batch_data, update_lr, update_step)
    accs = jax.block_until_ready(accs)
    assert accs.shape == (update_step + 2,)
    assert bool(jnp.all(jnp.isfinite(accs)))
    print("KERNEL_OK")
</pallas_src>

<mosaic_0001>
module attributes {stable_mosaic.version = 11 : i64} {
  func.func @_loss_grad_kernel(%arg0: memref<4x768xf32, #tpu.memory_space<vmem>>, %arg1: memref<4x768xf32, #tpu.memory_space<vmem>>, %arg2: memref<1x768xf32, #tpu.memory_space<vmem>>, %arg3: memref<8x36xf32, #tpu.memory_space<vmem>>, %arg4: memref<8x1xf32, #tpu.memory_space<vmem>>, %arg5: memref<4x72xf32, #tpu.memory_space<vmem>>, %arg6: memref<4x1xf32, #tpu.memory_space<vmem>>, %arg7: memref<72x4xf32, #tpu.memory_space<vmem>>, %arg8: memref<1x1xf32, #tpu.memory_space<smem>>, %arg9: memref<8x36xf32, #tpu.memory_space<vmem>>, %arg10: memref<8x1xf32, #tpu.memory_space<vmem>>, %arg11: memref<4x72xf32, #tpu.memory_space<vmem>>, %arg12: memref<4x1xf32, #tpu.memory_space<vmem>>, %arg13: memref<36x768xf32, #tpu.memory_space<vmem>>, %arg14: memref<72x768xf32, #tpu.memory_space<vmem>>) attributes {dimension_semantics = [], scalar_prefetch = 0 : i64, scratch_operands = 2 : i64, tpu.core_type = #tpu.core_type<tc>} {
    %c0 = arith.constant 0 : index
    %c0_0 = arith.constant 0 : index
    %0 = vector.load %arg2[%c0, %c0_0] : memref<1x768xf32, #tpu.memory_space<vmem>>, vector<1x768xf32>
    %c0_1 = arith.constant 0 : index
    %c0_2 = arith.constant 0 : index
    %1 = vector.load %arg0[%c0_1, %c0_2] : memref<4x768xf32, #tpu.memory_space<vmem>>, vector<4x768xf32>
    %c19_i32 = arith.constant 19 : i32
    %2 = tpu.dynamic_rotate %1 by %c19_i32 dim 1 : vector<4x768xf32>, i32 -> vector<4x768xf32>
    %c0_3 = arith.constant 0 : index
    %c0_4 = arith.constant 0 : index
    %3 = vector.load %arg13[%c0_3, %c0_4] : memref<36x768xf32, #tpu.memory_space<vmem>>, vector<4x768xf32>
    tpu.vector_store %arg13[%c0_3, %c0_4], %2 {strides = array<i32>} : memref<36x768xf32, #tpu.memory_space<vmem>>, vector<4x768xf32>,
    %c18_i32 = arith.constant 18 : i32
    %4 = tpu.dynamic_rotate %1 by %c18_i32 dim 1 : vector<4x768xf32>, i32 -> vector<4x768xf32>
    %c4 = arith.constant 4 : index
    %c0_5 = arith.constant 0 : index
    %5 = vector.load %arg13[%c4, %c0_5] : memref<36x768xf32, #tpu.memory_space<vmem>>, vector<4x768xf32>
    tpu.vector_store %arg13[%c4, %c0_5], %4 {strides = array<i32>} : memref<36x768xf32, #tpu.memory_space<vmem>>, vector<4x768xf32>,
    %c17_i32 = arith.constant 17 : i32
    %6 = tpu.dynamic_rotate %1 by %c17_i32 dim 1 : vector<4x768xf32>, i32 -> vector<4x768xf32>
    %c8 = arith.constant 8 : index
    %c0_6 = arith.constant 0 : index
    %7 = vector.load %arg13[%c8, %c0_6] : memref<36x768xf32, #tpu.memory_space<vmem>>, vector<4x768xf32>
    tpu.vector_store %arg13[%c8, %c0_6], %6 {strides = array<i32>} : memref<36x768xf32, #tpu.memory_space<vmem>>, vector<4x768xf32>,
    %c1_i32 = arith.constant 1 : i32
    %8 = tpu.dynamic_rotate %1 by %c1_i32 dim 1 : vector<4x768xf32>, i32 -> vector<4x768xf32>
    %c12 = arith.constant 12 : index
    %c0_7 = arith.constant 0 : index
    %9 = vector.load %arg13[%c12, %c0_7] : memref<36x768xf32, #tpu.memory_space<vmem>>, vector<4x768xf32>
    tpu.vector_store %arg13[%c12, %c0_7], %8 {strides = array<i32>} : memref<36x768xf32, #tpu.memory_space<vmem>>, vector<4x768xf32>,
    %c16 = arith.constant 16 : index
    %c0_8 = arith.constant 0 : index
    %10 = vector.load %arg13[%c16, %c0_8] : memref<36x768xf32, #tpu.memory_space<vmem>>, vector<4x768xf32>
    tpu.vector_store %arg13[%c16, %c0_8], %1 {strides = array<i32>} : memref<36x768xf32, #tpu.memory_space<vmem>>, vector<4x768xf32>,
    %c767_i32 = arith.constant 767 : i32
    %11 = tpu.dynamic_rotate %1 by %c767_i32 dim 1 : vector<4x768xf32>, i32 -> vector<4x768xf32>
    %c20 = arith.constant 20 : index
    %c0_9 = arith.constant 0 : index
    %12 = vector.load %arg13[%c20, %c0_9] : memref<36x768xf32, #tpu.memory_space<vmem>>, vector<4x768xf32>
    tpu.vector_store %arg13[%c20, %c0_9], %11 {strides = array<i32>} : memref<36x768xf32, #tpu.memory_space<vmem>>, vector<4x768xf32>,
    %c751_i32 = arith.constant 751 : i32
    %13 = tpu.dynamic_rotate %1 by %c751_i32 dim 1 : vector<4x768xf32>, i32 -> vector<4x768xf32>
    %c24 = arith.constant 24 : index
    %c0_10 = arith.constant 0 : index
    %14 = vector.load %arg13[%c24, %c0_10] : memref<36x768xf32, #tpu.memory_space<vmem>>, vector<4x768xf32>
    tpu.vector_store %arg13[%c24, %c0_10], %13 {strides = array<i32>} : memref<36x768xf32, #tpu.memory_space<vmem>>, vector<4x768xf32>,
    %c750_i32 = arith.constant 750 : i32
    %15 = tpu.dynamic_rotate %1 by %c750_i32 dim 1 : vector<4x768xf32>, i32 -> vector<4x768xf32>
    %c28 = arith.constant 28 : index
    %c0_11 = arith.constant 0 : index
    %16 = vector.load %arg13[%c28, %c0_11] : memref<36x768xf32, #tpu.memory_space<vmem>>, vector<4x768xf32>
    tpu.vector_store %arg13[%c28, %c0_11], %15 {strides = array<i32>} : memref<36x768xf32, #tpu.memory_space<vmem>>, vector<4x768xf32>,
    %c749_i32 = arith.constant 749 : i32
    %17 = tpu.dynamic_rotate %1 by %c749_i32 dim 1 : vector<4x768xf32>, i32 -> vector<4x768xf32>
    %c32 = arith.constant 32 : index
    %c0_12 = arith.constant 0 : index
    %18 = vector.load %arg13[%c32, %c0_12] : memref<36x768xf32, #tpu.memory_space<vmem>>, vector<4x768xf32>
    tpu.vector_store %arg13[%c32, %c0_12], %17 {strides = array<i32>} : memref<36x768xf32, #tpu.memory_space<vmem>>, vector<4x768xf32>,
    %c0_13 = arith.constant 0 : index
    %c0_14 = arith.constant 0 : index
    %19 = vector.load %arg3[%c0_13, %c0_14] : memref<8x36xf32, #tpu.memory_space<vmem>>, vector<8x36xf32>
    %c0_15 = arith.constant 0 : index
    %c0_16 = arith.constant 0 : index
    %20 = vector.load %arg13[%c0_15, %c0_16] : memref<36x768xf32, #tpu.memory_space<vmem>>, vector<36x768xf32>
    %cst = arith.constant dense<0.000000e+00> : vector<8x768xf32>
    %21 = tpu.matmul %19, %20, %cst {dimension_numbers = #tpu.dot_dimension_numbers<[1], [0], [0], [1], [0, 0, 1, 1], [], []>} : vector<8x36xf32>, vector<36x768xf32>, vector<8x768xf32> -> vector<8x768xf32>
    %c0_17 = arith.constant 0 : index
    %c0_18 = arith.constant 0 : index
    %22 = vector.load %arg4[%c0_17, %c0_18] : memref<8x1xf32, #tpu.memory_space<vmem>>, vector<8x1xf32>
    %23 = vector.broadcast %22 : vector<8x1xf32> to vector<8x768xf32>
    %24 = arith.addf %21, %23 : vector<8x768xf32>
    %cst_19 = arith.constant 0.000000e+00 : f32
    %25 = vector.broadcast %cst_19 : f32 to vector<8x768xf32>
    %26 = arith.maximumf %24, %25 : vector<8x768xf32>
    %27 = vector.broadcast %0 : vector<1x768xf32> to vector<8x768xf32>
    %28 = arith.mulf %26, %27 : vector<8x768xf32>
    %c19_i32_20 = arith.constant 19 : i32
    %29 = tpu.dynamic_rotate %28 by %c19_i32_20 dim 1 : vector<8x768xf32>, i32 -> vector<8x768xf32>
    %c0_21 = arith.constant 0 : index
    %c0_22 = arith.constant 0 : index
    %30 = vector.load %arg14[%c0_21, %c0_22] : memref<72x768xf32, #tpu.memory_space<vmem>>, vector<8x768xf32>
    tpu.vector_store %arg14[%c0_21, %c0_22], %29 {strides = array<i32>} : memref<72x768xf32, #tpu.memory_space<vmem>>, vector<8x768xf32>,
    %c18_i32_23 = arith.constant 18 : i32
    %31 = tpu.dynamic_rotate %28 by %c18_i32_23 dim 1 : vector<8x768xf32>, i32 -> vector<8x768xf32>
    %c8_24 = arith.constant 8 : index
    %c0_25 = arith.constant 0 : index
    %32 = vector.load %arg14[%c8_24, %c0_25] : memref<72x768xf32, #tpu.memory_space<vmem>>, vector<8x768xf32>
    tpu.vector_store %arg14[%c8_24, %c0_25], %31 {strides = array<i32>} : memref<72x768xf32, #tpu.memory_space<vmem>>, vector<8x768xf32>,
    %c17_i32_26 = arith.constant 17 : i32
    %33 = tpu.dynamic_rotate %28 by %c17_i32_26 dim 1 : vector<8x768xf32>, i32 -> vector<8x768xf32>
    %c16_27 = arith.constant 16 : index
    %c0_28 = arith.constant 0 : index
    %34 = vector.load %arg14[%c16_27, %c0_28] : memref<72x768xf32, #tpu.memory_space<vmem>>, vector<8x768xf32>
    tpu.vector_store %arg14[%c16_27, %c0_28], %33 {strides = array<i32>} : memref<72x768xf32, #tpu.memory_space<vmem>>, vector<8x768xf32>,
    %c1_i32_29 = arith.constant 1 : i32
    %35 = tpu.dynamic_rotate %28 by %c1_i32_29 dim 1 : vector<8x768xf32>, i32 -> vector<8x768xf32>
    %c24_30 = arith.constant 24 : index
    %c0_31 = arith.constant 0 : index
    %36 = vector.load %arg14[%c24_30, %c0_31] : memref<72x768xf32, #tpu.memory_space<vmem>>, vector<8x768xf32>
    tpu.vector_store %arg14[%c24_30, %c0_31], %35 {strides = array<i32>} : memref<72x768xf32, #tpu.memory_space<vmem>>, vector<8x768xf32>,
    %c32_32 = arith.constant 32 : index
    %c0_33 = arith.constant 0 : index
    %37 = vector.load %arg14[%c32_32, %c0_33] : memref<72x768xf32, #tpu.memory_space<vmem>>, vector<8x768xf32>
    tpu.vector_store %arg14[%c32_32, %c0_33], %28 {strides = array<i32>} : memref<72x768xf32, #tpu.memory_space<vmem>>, vector<8x768xf32>,
    %c767_i32_34 = arith.constant 767 : i32
    %38 = tpu.dynamic_rotate %28 by %c767_i32_34 dim 1 : vector<8x768xf32>, i32 -> vector<8x768xf32>
    %c40 = arith.constant 40 : index
    %c0_35 = arith.constant 0 : index
    %39 = vector.load %arg14[%c40, %c0_35] : memref<72x768xf32, #tpu.memory_space<vmem>>, vector<8x768xf32>
    tpu.vector_store %arg14[%c40, %c0_35], %38 {strides = array<i32>} : memref<72x768xf32, #tpu.memory_space<vmem>>, vector<8x768xf32>,
    %c751_i32_36 = arith.constant 751 : i32
    %40 = tpu.dynamic_rotate %28 by %c751_i32_36 dim 1 : vector<8x768xf32>, i32 -> vector<8x768xf32>
    %c48 = arith.constant 48 : index
    %c0_37 = arith.constant 0 : index
    %41 = vector.load %arg14[%c48, %c0_37] : memref<72x768xf32, #tpu.memory_space<vmem>>, vector<8x768xf32>
    tpu.vector_store %arg14[%c48, %c0_37], %40 {strides = array<i32>} : memref<72x768xf32, #tpu.memory_space<vmem>>, vector<8x768xf32>,
    %c750_i32_38 = arith.constant 750 : i32
    %42 = tpu.dynamic_rotate %28 by %c750_i32_38 dim 1 : vector<8x768xf32>, i32 -> vector<8x768xf32>
    %c56 = arith.constant 56 : index
    %c0_39 = arith.constant 0 : index
    %43 = vector.load %arg14[%c56, %c0_39] : memref<72x768xf32, #tpu.memory_space<vmem>>, vector<8x768xf32>
    tpu.vector_store %arg14[%c56, %c0_39], %42 {strides = array<i32>} : memref<72x768xf32, #tpu.memory_space<vmem>>, vector<8x768xf32>,
    %c749_i32_40 = arith.constant 749 : i32
    %44 = tpu.dynamic_rotate %28 by %c749_i32_40 dim 1 : vector<8x768xf32>, i32 -> vector<8x768xf32>
    %c64 = arith.constant 64 : index
    %c0_41 = arith.constant 0 : index
    %45 = vector.load %arg14[%c64, %c0_41] : memref<72x768xf32, #tpu.memory_space<vmem>>, vector<8x768xf32>
    tpu.vector_store %arg14[%c64, %c0_41], %44 {strides = array<i32>} : memref<72x768xf32, #tpu.memory_space<vmem>>, vector<8x768xf32>,
    %c0_42 = arith.constant 0 : index
    %c0_43 = arith.constant 0 : index
    %46 = vector.load %arg5[%c0_42, %c0_43] : memref<4x72xf32, #tpu.memory_space<vmem>>, vector<4x72xf32>
    %c0_44 = arith.constant 0 : index
    %c0_45 = arith.constant 0 : index
    %47 = vector.load %arg14[%c0_44, %c0_45] : memref<72x768xf32, #tpu.memory_space<vmem>>, vector<72x768xf32>
    %cst_46 = arith.constant dense<0.000000e+00> : vector<4x768xf32>
    %48 = tpu.matmul %46, %47, %cst_46 {dimension_numbers = #tpu.dot_dimension_numbers<[1], [0], [0], [1], [0, 0, 1, 1], [], []>} : vector<4x72xf32>, vector<72x768xf32>, vector<4x768xf32> -> vector<4x768xf32>
    %c0_47 = arith.constant 0 : index
    %c0_48 = arith.constant 0 : index
    %49 = vector.load %arg6[%c0_47, %c0_48] : memref<4x1xf32, #tpu.memory_space<vmem>>, vector<4x1xf32>
    %50 = vector.broadcast %49 : vector<4x1xf32> to vector<4x768xf32>
    %51 = arith.addf %48, %50 : vector<4x768xf32>
    %c0_49 = arith.constant 0 : index
    %c0_50 = arith.constant 0 : index
    %52 = vector.load %arg1[%c0_49, %c0_50] : memref<4x768xf32, #tpu.memory_space<vmem>>, vector<4x768xf32>
    %53 = arith.subf %51, %52 : vector<4x768xf32>
    %54 = vector.broadcast %0 : vector<1x768xf32> to vector<4x768xf32>
    %55 = arith.mulf %53, %54 : vector<4x768xf32>
    %56 = arith.mulf %55, %55 : vector<4x768xf32>
    %57 = vector.shape_cast %56 : vector<4x768xf32> to vector<1x4x768xf32>
    %cst_51 = arith.constant dense<0.000000e+00> : vector<1xf32>
    %58 = vector.multi_reduction <add>, %57, %cst_51 [1, 2] : vector<1x4x768xf32> to vector<1xf32>
    %59 = vector.shape_cast %58 : vector<1xf32> to vector<1x1x1xf32>
    %60 = vector.extract %59[0, 0, 0] : f32 from vector<1x1x1xf32>
    %cst_52 = arith.constant 4.8828125E-4 : f32
    %61 = arith.mulf %60, %cst_52 : f32
    %c0_53 = arith.constant 0 : index
    %c0_54 = arith.constant 0 : index
    %62 = memref.load %arg8[%c0_53, %c0_54] : memref<1x1xf32, #tpu.memory_space<smem>>
    memref.store %61, %arg8[%c0_53, %c0_54] : memref<1x1xf32, #tpu.memory_space<smem>>
    %cst_55 = arith.constant 9.765625E-4 : f32
    %63 = vector.broadcast %cst_55 : f32 to vector<4x768xf32>
    %64 = arith.mulf %55, %63 : vector<4x768xf32>
    %cst_56 = arith.constant dense<0.000000e+00> : vector<4xf32>
    %65 = vector.multi_reduction <add>, %64, %cst_56 [1] : vector<4x768xf32> to vector<4xf32>
    %66 = vector.shape_cast %65 : vector<4xf32> to vector<4x1xf32>
    %c0_57 = arith.constant 0 : index
    %c0_58 = arith.constant 0 : index
    %67 = vector.load %arg12[%c0_57, %c0_58] : memref<4x1xf32, #tpu.memory_space<vmem>>, vector<4x1xf32>
    tpu.vector_store %arg12[%c0_57, %c0_58], %66 {strides = array<i32>} : memref<4x1xf32, #tpu.memory_space<vmem>>, vector<4x1xf32>,
    %c0_59 = arith.constant 0 : index
    %c0_60 = arith.constant 0 : index
    %68 = vector.load %arg14[%c0_59, %c0_60] : memref<72x768xf32, #tpu.memory_space<vmem>>, vector<72x768xf32>
    %cst_61 = arith.constant dense<0.000000e+00> : vector<4x72xf32>
    %69 = tpu.matmul %64, %68, %cst_61 {dimension_numbers = #tpu.dot_dimension_numbers<[1], [1], [0], [0], [0, 0, 1, 0], [], []>} : vector<4x768xf32>, vector<72x768xf32>, vector<4x72xf32> -> vector<4x72xf32>
    %c0_62 = arith.constant 0 : index
    %c0_63 = arith.constant 0 : index
    %70 = vector.load %arg11[%c0_62, %c0_63] : memref<4x72xf32, #tpu.memory_space<vmem>>, vector<4x72xf32>
    tpu.vector_store %arg11[%c0_62, %c0_63], %69 {strides = array<i32>} : memref<4x72xf32, #tpu.memory_space<vmem>>, vector<4x72xf32>,
    %c0_64 = arith.constant 0 : index
    %c0_65 = arith.constant 0 : index
    %71 = vector.load %arg7[%c0_64, %c0_65] : memref<72x4xf32, #tpu.memory_space<vmem>>, vector<72x4xf32>
    %cst_66 = arith.constant dense<0.000000e+00> : vector<72x768xf32>
    %72 = tpu.matmul %71, %64, %cst_66 {dimension_numbers = #tpu.dot_dimension_numbers<[1], [0], [0], [1], [0, 0, 1, 1], [], []>} : vector<72x4xf32>, vector<4x768xf32>, vector<72x768xf32> -> vector<72x768xf32>
    %cst_67 = arith.constant 0.000000e+00 : f32
    %73 = vector.broadcast %cst_67 : f32 to vector<8x768xf32>
    %74 = vector.extract_strided_slice %72 {offsets = [0, 0], sizes = [8, 768], strides = [1, 1]} : vector<72x768xf32> to vector<8x768xf32>
    %c749_i32_68 = arith.constant 749 : i32
    %75 = tpu.dynamic_rotate %74 by %c749_i32_68 dim 1 : vector<8x768xf32>, i32 -> vector<8x768xf32>
    %76 = arith.addf %73, %75 : vector<8x768xf32>
    %77 = vector.extract_strided_slice %72 {offsets = [8, 0], sizes = [8, 768], strides = [1, 1]} : vector<72x768xf32> to vector<8x768xf32>
    %c750_i32_69 = arith.constant 750 : i32
    %78 = tpu.dynamic_rotate %77 by %c750_i32_69 dim 1 : vector<8x768xf32>, i32 -> vector<8x768xf32>
    %79 = arith.addf %76, %78 : vector<8x768xf32>
    %80 = vector.extract_strided_slice %72 {offsets = [16, 0], sizes = [8, 768], strides = [1, 1]} : vector<72x768xf32> to vector<8x768xf32>
    %c751_i32_70 = arith.constant 751 : i32
    %81 = tpu.dynamic_rotate %80 by %c751_i32_70 dim 1 : vector<8x768xf32>, i32 -> vector<8x768xf32>
    %82 = arith.addf %79, %81 : vector<8x768xf32>
    %83 = vector.extract_strided_slice %72 {offsets = [24, 0], sizes = [8, 768], strides = [1, 1]} : vector<72x768xf32> to vector<8x768xf32>
    %c767_i32_71 = arith.constant 767 : i32
    %84 = tpu.dynamic_rotate %83 by %c767_i32_71 dim 1 : vector<8x768xf32>, i32 -> vector<8x768xf32>
    %85 = arith.addf %82, %84 : vector<8x768xf32>
    %86 = vector.extract_strided_slice %72 {offsets = [32, 0], sizes = [8, 768], strides = [1, 1]} : vector<72x768xf32> to vector<8x768xf32>
    %87 = arith.addf %85, %86 : vector<8x768xf32>
    %88 = vector.extract_strided_slice %72 {offsets = [40, 0], sizes = [8, 768], strides = [1, 1]} : vector<72x768xf32> to vector<8x768xf32>
    %c1_i32_72 = arith.constant 1 : i32
    %89 = tpu.dynamic_rotate %88 by %c1_i32_72 dim 1 : vector<8x768xf32>, i32 -> vector<8x768xf32>
    %90 = arith.addf %87, %89 : vector<8x768xf32>
    %91 = vector.extract_strided_slice %72 {offsets = [48, 0], sizes = [8, 768], strides = [1, 1]} : vector<72x768xf32> to vector<8x768xf32>
    %c17_i32_73 = arith.constant 17 : i32
    %92 = tpu.dynamic_rotate %91 by %c17_i32_73 dim 1 : vector<8x768xf32>, i32 -> vector<8x768xf32>
    %93 = arith.addf %90, %92 : vector<8x768xf32>
    %94 = vector.extract_strided_slice %72 {offsets = [56, 0], sizes = [8, 768], strides = [1, 1]} : vector<72x768xf32> to vector<8x768xf32>
    %c18_i32_74 = arith.constant 18 : i32
    %95 = tpu.dynamic_rotate %94 by %c18_i32_74 dim 1 : vector<8x768xf32>, i32 -> vector<8x768xf32>
    %96 = arith.addf %93, %95 : vector<8x768xf32>
    %97 = vector.extract_strided_slice %72 {offsets = [64, 0], sizes = [8, 768], strides = [1, 1]} : vector<72x768xf32> to vector<8x768xf32>
    %c19_i32_75 = arith.constant 19 : i32
    %98 = tpu.dynamic_rotate %97 by %c19_i32_75 dim 1 : vector<8x768xf32>, i32 -> vector<8x768xf32>
    %99 = arith.addf %96, %98 : vector<8x768xf32>
    %cst_76 = arith.constant 0.000000e+00 : f32
    %100 = vector.broadcast %cst_76 : f32 to vector<8x768xf32>
    %101 = arith.cmpf ogt, %24, %100 : vector<8x768xf32>
    %102 = vector.broadcast %0 : vector<1x768xf32> to vector<8x768xf32>
    %103 = arith.mulf %99, %102 : vector<8x768xf32>
    %cst_77 = arith.constant 0.000000e+00 : f32
    %104 = vector.broadcast %cst_77 : f32 to vector<8x768xf32>
    %105 = arith.select %101, %103, %104 : vector<8x768xi1>, vector<8x768xf32>
    %cst_78 = arith.constant dense<0.000000e+00> : vector<8xf32>
    %106 = vector.multi_reduction <add>, %105, %cst_78 [1] : vector<8x768xf32> to vector<8xf32>
    %107 = vector.shape_cast %106 : vector<8xf32> to vector<8x1xf32>
    %c0_79 = arith.constant 0 : index
    %c0_80 = arith.constant 0 : index
    %108 = vector.load %arg10[%c0_79, %c0_80] : memref<8x1xf32, #tpu.memory_space<vmem>>, vector<8x1xf32>
    tpu.vector_store %arg10[%c0_79, %c0_80], %107 {strides = array<i32>} : memref<8x1xf32, #tpu.memory_space<vmem>>, vector<8x1xf32>,
    %c0_81 = arith.constant 0 : index
    %c0_82 = arith.constant 0 : index
    %109 = vector.load %arg13[%c0_81, %c0_82] : memref<36x768xf32, #tpu.memory_space<vmem>>, vector<36x768xf32>
    %cst_83 = arith.constant dense<0.000000e+00> : vector<8x36xf32>
    %110 = tpu.matmul %105, %109, %cst_83 {dimension_numbers = #tpu.dot_dimension_numbers<[1], [1], [0], [0], [0, 0, 1, 0], [], []>} : vector<8x768xf32>, vector<36x768xf32>, vector<8x36xf32> -> vector<8x36xf32>
    %c0_84 = arith.constant 0 : index
    %c0_85 = arith.constant 0 : index
    %111 = vector.load %arg9[%c0_84, %c0_85] : memref<8x36xf32, #tpu.memory_space<vmem>>, vector<8x36xf32>
    tpu.vector_store %arg9[%c0_84, %c0_85], %110 {strides = array<i32>} : memref<8x36xf32, #tpu.memory_space<vmem>>, vector<8x36xf32>,
    return
  }
}

</mosaic_0001>

<llo_original>
// kernel: tpu_custom_call.1
$region0: #{tpu_custom_call.1}
  #allocation0 [shape = 'u32[]', space=smem, size = 0x4, offset = 0x4, fixed_abs, tag = 'smem constant byte address 0x4 - core index']
  #allocation1 [shape = 'u32[144,128]{1,0:T(1,128)}', space=vmem, size = 0x12000, scoped, tag = 'internal scratch']
  #allocation2 [shape = 'f32[36,768]{1,0:T(8,128)}', space=vmem, size = 0x1e000, scoped, tag = 'scratch operand']
  #allocation3 [shape = 'f32[72,768]{1,0:T(8,128)}', space=vmem, size = 0x36000, scoped, tag = 'scratch operand']
  %s0 = inlined_call_operand.vmem [shape: f32[4,768], index: 0, kind: input, shape index: {}]
  %s1 = inlined_call_operand.vmem [shape: f32[4,768], index: 1, kind: input, shape index: {}]
  %s2 = inlined_call_operand.vmem [shape: f32[1,768], index: 2, kind: input, shape index: {}]
  %s3 = inlined_call_operand.vmem [shape: f32[8,36], index: 3, kind: input, shape index: {}]
  %s4 = inlined_call_operand.vmem [shape: f32[8,1], index: 4, kind: input, shape index: {}]
  %s5 = inlined_call_operand.vmem [shape: f32[4,72], index: 5, kind: input, shape index: {}]
  %s6 = inlined_call_operand.vmem [shape: f32[4,1], index: 6, kind: input, shape index: {}]
  %s7 = inlined_call_operand.vmem [shape: f32[72,4], index: 7, kind: input, shape index: {}]
  %s8 = inlined_call_operand.hbm [shape: f32[1,1], index: 8, kind: output, shape index: {0}]
  %s9 = inlined_call_operand.hbm [shape: f32[8,36], index: 9, kind: output, shape index: {1}]
  %s10 = inlined_call_operand.vmem [shape: f32[8,1], index: 10, kind: output, shape index: {2}]
  %s11 = inlined_call_operand.hbm [shape: f32[4,72], index: 11, kind: output, shape index: {3}]
  %s12 = inlined_call_operand.vmem [shape: f32[4,1], index: 12, kind: output, shape index: {4}]
  %13 = xla_tuple %s8, %s9, %s10, %s11, %s12
  %s14 = sld [smem:[#allocation0]]
  $region74: #{tpu_custom_call.1} parent=0
    _
  %s16 = ssub.s32 1, %s14
  %s17 = scalar_select 0, %s16, %s14
  $region1: #{tpu_custom_call.1} parent=0
    #allocation4 [shape = 'u8[512]{0}', space=smem, size = 0x200, scoped, tag = 'output window, operand 0, single buffered']
    #allocation5 [shape = 's32[1]{0}', space=sflag, size = 0x4, scoped, tag = 'scoped memory for tpu_custom_call.1']
    #allocation6 [shape = 's32[1]{0}', space=sflag, size = 0x4, scoped, tag = 'scoped memory for tpu_custom_call.1']
    #allocation7 [shape = 'u8[4096]{0}', space=vmem, size = 0x1000, scoped, tag = 'output window, operand 1, single buffered']
    #allocation8 [shape = 'u8[2048]{0}', space=vmem, size = 0x800, scoped, tag = 'output window, operand 3, single buffered']
    #allocation9 [shape = 's32[1]{0}', space=sflag, size = 0x4, scoped, tag = 'scoped memory for tpu_custom_call.1']
    %18 = vsyncpa [#allocation6], 0
    %19 = vsyncpa [#allocation5], 0
    %20 = vsyncpa [#allocation9], 0
    // Predicated region
    $region2: #{tpu_custom_call.1} parent=1 // pred_check
      _
    $region3: #{tpu_custom_call.1} parent=1 // pred_check_branch
      %22 = sbr.rel (0) target = $region5
    $region4: #{tpu_custom_call.1} parent=1 // pred_region
      _
    $region5: #{tpu_custom_call.1} parent=1 // pred_fallthru
      _
    // Predicated region
    $region6: #{tpu_custom_call.1} parent=1 // pred_check
      _
    $region7: #{tpu_custom_call.1} parent=1 // pred_check_branch
      %24 = sbr.rel (0) target = $region9
    $region8: #{tpu_custom_call.1} parent=1 // pred_region
      _
    $region9: #{tpu_custom_call.1} parent=1 // pred_fallthru
      _
    // Predicated region
    $region10: #{tpu_custom_call.1} parent=1 // pred_check
      _
    $region11: #{tpu_custom_call.1} parent=1 // pred_check_branch
      %26 = sbr.rel (0) target = $region13
    $region12: #{tpu_custom_call.1} parent=1 // pred_region
      _
    $region13: #{tpu_custom_call.1} parent=1 // pred_fallthru
      _
    // Predicated region
    $region14: #{tpu_custom_call.1} parent=1 // pred_check
      _
    $region15: #{tpu_custom_call.1} parent=1 // pred_check_branch
      %28 = sbr.rel (0) target = $region17
    $region16: #{tpu_custom_call.1} parent=1 // pred_region
      _
    $region17: #{tpu_custom_call.1} parent=1 // pred_fallthru
      _
    // Predicated region
    $region18: #{tpu_custom_call.1} parent=1 // pred_check
      _
    $region19: #{tpu_custom_call.1} parent=1 // pred_check_branch
      %30 = sbr.rel (0) target = $region21
    $region20: #{tpu_custom_call.1} parent=1 // pred_region
      _
    $region21: #{tpu_custom_call.1} parent=1 // pred_fallthru
      _
    // Predicated region
    $region22: #{tpu_custom_call.1} parent=1 // pred_check
      _
    $region23: #{tpu_custom_call.1} parent=1 // pred_check_branch
      %32 = sbr.rel (0) target = $region25
    $region24: #{tpu_custom_call.1} parent=1 // pred_region
      _
    $region25: #{tpu_custom_call.1} parent=1 // pred_fallthru
      _
    // Predicated region
    $region26: #{tpu_custom_call.1} parent=1 // pred_check
      _
    $region27: #{tpu_custom_call.1} parent=1 // pred_check_branch
      %34 = sbr.rel (0) target = $region29
    $region28: #{tpu_custom_call.1} parent=1 // pred_region
      _
    $region29: #{tpu_custom_call.1} parent=1 // pred_fallthru
      _
    // Predicated region
    $region30: #{tpu_custom_call.1} parent=1 // pred_check
      _
    $region31: #{tpu_custom_call.1} parent=1 // pred_check_branch
      %36 = sbr.rel (0) target = $region33
    $region32: #{tpu_custom_call.1} parent=1 // pred_region
      _
    $region33: #{tpu_custom_call.1} parent=1 // pred_fallthru
      _
    %v37 = vld [vmem:[%s2] sm:$0x3f]
    %v38 = vld [vmem:[%s0] sm:$0xff]
    %v39 = vld [vmem:[%s0 + $0x8] sm:$0xff]
    %v40 = vld [vmem:[%s0 + $0x10] sm:$0xff]
    %v44 = vcombine.high %v38, %v38
    %v45 = vcombine.high %v39, %v39
    %v46 = vcombine.high %v40, %v40
    %50 = vrot.lane.b32.xlu0 %v38, 19
    %v51 = vpop.permute.xlu0 %50
    %52 = vrot.lane.b32.xlu0 %v44, 19
    %v53 = vpop.permute.xlu0 %52
    %54 = vrot.lane.b32.xlu0 %v39, 19
    %v55 = vpop.permute.xlu0 %54
    %56 = vrot.lane.b32.xlu0 %v45, 19
    %v57 = vpop.permute.xlu0 %56
    %58 = vrot.lane.b32.xlu0 %v40, 19
    %v59 = vpop.permute.xlu0 %58
    %60 = vrot.lane.b32.xlu0 %v46, 19
    %v61 = vpop.permute.xlu0 %60
    %v62 = vlaneseq
    %v63 = vand.u32 %v62, 127
    %vm64 = vcmp.lt.s32.totalorder %v63, 19
    %v65 = vsel %vm64, %v59, %v61
    %v66 = vsel %vm64, %v57, %v59
    %v67 = vsel %vm64, %v55, %v57
    %v68 = vsel %vm64, %v53, %v55
    %v69 = vsel %vm64, %v51, %v53
    %v70 = vsel %vm64, %v61, %v51
    %71 = vst [vmem:[#allocation2] sm:$0xf] %v70
    %72 = vst [vmem:[#allocation2 + $0x8] sm:$0xf] %v69
    %73 = vst [vmem:[#allocation2 + $0x10] sm:$0xf] %v68
    %74 = vst [vmem:[#allocation2 + $0x18] sm:$0xf] %v67
    %75 = vst [vmem:[#allocation2 + $0x20] sm:$0xf] %v66
    %76 = vst [vmem:[#allocation2 + $0x28] sm:$0xf] %v65
    %77 = vrot.lane.b32.xlu0 %v38, 18
    %v78 = vpop.permute.xlu0 %77
    %79 = vrot.lane.b32.xlu0 %v44, 18
    %v80 = vpop.permute.xlu0 %79
    %81 = vrot.lane.b32.xlu0 %v39, 18
    %v82 = vpop.permute.xlu0 %81
    %83 = vrot.lane.b32.xlu0 %v45, 18
    %v84 = vpop.permute.xlu0 %83
    %85 = vrot.lane.b32.xlu0 %v40, 18
    %v86 = vpop.permute.xlu0 %85
    %87 = vrot.lane.b32.xlu0 %v46, 18
    %v88 = vpop.permute.xlu0 %87
    %vm89 = vcmp.lt.s32.totalorder %v63, 18
    %v90 = vsel %vm89, %v86, %v88
    %v91 = vsel %vm89, %v84, %v86
    %v92 = vsel %vm89, %v82, %v84
    %v93 = vsel %vm89, %v80, %v82
    %v94 = vsel %vm89, %v78, %v80
    %v95 = vsel %vm89, %v88, %v78
    %v102 = vrot.slane %v95, 4
    %v103 = vrot.slane %v94, 4
    %v104 = vrot.slane %v93, 4
    %v105 = vrot.slane %v92, 4
    %v106 = vrot.slane %v91, 4
    %v107 = vrot.slane %v90, 4
    %114 = vst [vmem:[#allocation2] sm:$0xf0] %v102
    %115 = vst [vmem:[#allocation2 + $0x8] sm:$0xf0] %v103
    %116 = vst [vmem:[#allocation2 + $0x10] sm:$0xf0] %v104
    %117 = vst [vmem:[#allocation2 + $0x18] sm:$0xf0] %v105
    %118 = vst [vmem:[#allocation2 + $0x20] sm:$0xf0] %v106
    %119 = vst [vmem:[#allocation2 + $0x28] sm:$0xf0] %v107
    %120 = vrot.lane.b32.xlu0 %v38, 17
    %v121 = vpop.permute.xlu0 %120
    %122 = vrot.lane.b32.xlu0 %v44, 17
    %v123 = vpop.permute.xlu0 %122
    %124 = vrot.lane.b32.xlu0 %v39, 17
    %v125 = vpop.permute.xlu0 %124
    %126 = vrot.lane.b32.xlu0 %v45, 17
    %v127 = vpop.permute.xlu0 %126
    %128 = vrot.lane.b32.xlu0 %v40, 17
    %v129 = vpop.permute.xlu0 %128
    %130 = vrot.lane.b32.xlu0 %v46, 17
    %v131 = vpop.permute.xlu0 %130
    %vm132 = vcmp.lt.s32.totalorder %v63, 17
    %v133 = vsel %vm132, %v129, %v131
    %v134 = vsel %vm132, %v127, %v129
    %v135 = vsel %vm132, %v125, %v127
    %v136 = vsel %vm132, %v123, %v125
    %v137 = vsel %vm132, %v121, %v123
    %v138 = vsel %vm132, %v131, %v121
    %139 = vst [vmem:[#allocation2 + $0x30] sm:$0xf] %v138
    %140 = vst [vmem:[#allocation2 + $0x38] sm:$0xf] %v137
    %141 = vst [vmem:[#allocation2 + $0x40] sm:$0xf] %v136
    %142 = vst [vmem:[#allocation2 + $0x48] sm:$0xf] %v135
    %143 = vst [vmem:[#allocation2 + $0x50] sm:$0xf] %v134
    %144 = vst [vmem:[#allocation2 + $0x58] sm:$0xf] %v133
    %145 = vrot.lane.b32.xlu0 %v38, 1
    %v146 = vpop.permute.xlu0 %145
    %147 = vrot.lane.b32.xlu0 %v44, 1
    %v148 = vpop.permute.xlu0 %147
    %149 = vrot.lane.b32.xlu0 %v39, 1
    %v150 = vpop.permute.xlu0 %149
    %151 = vrot.lane.b32.xlu0 %v45, 1
    %v152 = vpop.permute.xlu0 %151
    %153 = vrot.lane.b32.xlu0 %v40, 1
    %v154 = vpop.permute.xlu0 %153
    %155 = vrot.lane.b32.xlu0 %v46, 1
    %v156 = vpop.permute.xlu0 %155
    %vm157 = vcmp.lt.s32.totalorder %v63, 1
    %v158 = vsel %vm157, %v154, %v156
    %v159 = vsel %vm157, %v152, %v154
    %v160 = vsel %vm157, %v150, %v152
    %v161 = vsel %vm157, %v148, %v150
    %v162 = vsel %vm157, %v146, %v148
    %v163 = vsel %vm157, %v156, %v146
    %v170 = vrot.slane %v163, 4
    %v171 = vrot.slane %v162, 4
    %v172 = vrot.slane %v161, 4
    %v173 = vrot.slane %v160, 4
    %v174 = vrot.slane %v159, 4
    %v175 = vrot.slane %v158, 4
    %182 = vst [vmem:[#allocation2 + $0x30] sm:$0xf0] %v170
    %183 = vst [vmem:[#allocation2 + $0x38] sm:$0xf0] %v171
    %184 = vst [vmem:[#allocation2 + $0x40] sm:$0xf0] %v172
    %185 = vst [vmem:[#allocation2 + $0x48] sm:$0xf0] %v173
    %186 = vst [vmem:[#allocation2 + $0x50] sm:$0xf0] %v174
    %187 = vst [vmem:[#allocation2 + $0x58] sm:$0xf0] %v175
    %188 = vst [vmem:[#allocation2 + $0x60] sm:$0xf] %v38
    %189 = vst [vmem:[#allocation2 + $0x68] sm:$0xf] %v44
    %190 = vst [vmem:[#allocation2 + $0x70] sm:$0xf] %v39
    %191 = vst [vmem:[#allocation2 + $0x78] sm:$0xf] %v45
    %192 = vst [vmem:[#allocation2 + $0x80] sm:$0xf] %v40
    %193 = vst [vmem:[#allocation2 + $0x88] sm:$0xf] %v46
    %194 = vrot.lane.b32.xlu0 %v38, 127
    %v195 = vpop.permute.xlu0 %194
    %196 = vrot.lane.b32.xlu0 %v44, 127
    %v197 = vpop.permute.xlu0 %196
    %198 = vrot.lane.b32.xlu0 %v39, 127
    %v199 = vpop.permute.xlu0 %198
    %200 = vrot.lane.b32.xlu0 %v45, 127
    %v201 = vpop.permute.xlu0 %200
    %202 = vrot.lane.b32.xlu0 %v40, 127
    %v203 = vpop.permute.xlu0 %202
    %204 = vrot.lane.b32.xlu0 %v46, 127
    %v205 = vpop.permute.xlu0 %204
    %vm206 = vcmp.lt.s32.totalorder %v63, 127
    %v207 = vsel %vm206, %v203, %v205
    %v208 = vsel %vm206, %v201, %v203
    %v209 = vsel %vm206, %v199, %v201
    %v210 = vsel %vm206, %v197, %v199
    %v211 = vsel %vm206, %v195, %v197
    %v212 = vsel %vm206, %v205, %v195
    %v219 = vrot.slane %v211, 4
    %v220 = vrot.slane %v210, 4
    %v221 = vrot.slane %v209, 4
    %v222 = vrot.slane %v208, 4
    %v223 = vrot.slane %v207, 4
    %v224 = vrot.slane %v212, 4
    %231 = vst [vmem:[#allocation2 + $0x60] sm:$0xf0] %v219
    %232 = vst [vmem:[#allocation2 + $0x68] sm:$0xf0] %v220
    %233 = vst [vmem:[#allocation2 + $0x70] sm:$0xf0] %v221
    %234 = vst [vmem:[#allocation2 + $0x78] sm:$0xf0] %v222
    %235 = vst [vmem:[#allocation2 + $0x80] sm:$0xf0] %v223
    %236 = vst [vmem:[#allocation2 + $0x88] sm:$0xf0] %v224
    %237 = vrot.lane.b32.xlu0 %v38, 111
    %v238 = vpop.permute.xlu0 %237
    %239 = vrot.lane.b32.xlu0 %v44, 111
    %v240 = vpop.permute.xlu0 %239
    %241 = vrot.lane.b32.xlu0 %v39, 111
    %v242 = vpop.permute.xlu0 %241
    %243 = vrot.lane.b32.xlu0 %v45, 111
    %v244 = vpop.permute.xlu0 %243
    %245 = vrot.lane.b32.xlu0 %v40, 111
    %v246 = vpop.permute.xlu0 %245
    %247 = vrot.lane.b32.xlu0 %v46, 111
    %v248 = vpop.permute.xlu0 %247
    %vm249 = vcmp.lt.s32.totalorder %v63, 111
    %v250 = vsel %vm249, %v246, %v248
    %v251 = vsel %vm249, %v244, %v246
    %v252 = vsel %vm249, %v242, %v244
    %v253 = vsel %vm249, %v240, %v242
    %v254 = vsel %vm249, %v238, %v240
    %v255 = vsel %vm249, %v248, %v238
    %256 = vst [vmem:[#allocation2 + $0x90] sm:$0xf] %v254
    %257 = vst [vmem:[#allocation2 + $0x98] sm:$0xf] %v253
    %258 = vst [vmem:[#allocation2 + $0xa0] sm:$0xf] %v252
    %259 = vst [vmem:[#allocation2 + $0xa8] sm:$0xf] %v251
    %260 = vst [vmem:[#allocation2 + $0xb0] sm:$0xf] %v250
    %261 = vst [vmem:[#allocation2 + $0xb8] sm:$0xf] %v255
    %262 = vrot.lane.b32.xlu0 %v38, 110
    %v263 = vpop.permute.xlu0 %262
    %264 = vrot.lane.b32.xlu0 %v44, 110
    %v265 = vpop.permute.xlu0 %264
    %266 = vrot.lane.b32.xlu0 %v39, 110
    %v267 = vpop.permute.xlu0 %266
    %268 = vrot.lane.b32.xlu0 %v45, 110
    %v269 = vpop.permute.xlu0 %268
    %270 = vrot.lane.b32.xlu0 %v40, 110
    %v271 = vpop.permute.xlu0 %270
    %272 = vrot.lane.b32.xlu0 %v46, 110
    %v273 = vpop.permute.xlu0 %272
    %vm274 = vcmp.lt.s32.totalorder %v63, 110
    %v275 = vsel %vm274, %v271, %v273
    %v276 = vsel %vm274, %v269, %v271
    %v277 = vsel %vm274, %v267, %v269
    %v278 = vsel %vm274, %v265, %v267
    %v279 = vsel %vm274, %v263, %v265
    %v280 = vsel %vm274, %v273, %v263
    %v287 = vrot.slane %v279, 4
    %v288 = vrot.slane %v278, 4
    %v289 = vrot.slane %v277, 4
    %v290 = vrot.slane %v276, 4
    %v291 = vrot.slane %v275, 4
    %v292 = vrot.slane %v280, 4
    %299 = vst [vmem:[#allocation2 + $0x90] sm:$0xf0] %v287
    %300 = vst [vmem:[#allocation2 + $0x98] sm:$0xf0] %v288
    %301 = vst [vmem:[#allocation2 + $0xa0] sm:$0xf0] %v289
    %302 = vst [vmem:[#allocation2 + $0xa8] sm:$0xf0] %v290
    %303 = vst [vmem:[#allocation2 + $0xb0] sm:$0xf0] %v291
    %304 = vst [vmem:[#allocation2 + $0xb8] sm:$0xf0] %v292
    %305 = vrot.lane.b32.xlu0 %v38, 109
    %v306 = vpop.permute.xlu0 %305
    %307 = vrot.lane.b32.xlu0 %v44, 109
    %v308 = vpop.permute.xlu0 %307
    %309 = vrot.lane.b32.xlu0 %v39, 109
    %v310 = vpop.permute.xlu0 %309
    %311 = vrot.lane.b32.xlu0 %v45, 109
    %v312 = vpop.permute.xlu0 %311
    %313 = vrot.lane.b32.xlu0 %v40, 109
    %v314 = vpop.permute.xlu0 %313
    %315 = vrot.lane.b32.xlu0 %v46, 109
    %v316 = vpop.permute.xlu0 %315
    %vm317 = vcmp.lt.s32.totalorder %v63, 109
    %v318 = vsel %vm317, %v314, %v316
    %v319 = vsel %vm317, %v312, %v314
    %v320 = vsel %vm317, %v310, %v312
    %v321 = vsel %vm317, %v308, %v310
    %v322 = vsel %vm317, %v306, %v308
    %v323 = vsel %vm317, %v316, %v306
    %324 = vst [vmem:[#allocation2 + $0xc0] sm:$0xf] %v322
    %325 = vst [vmem:[#allocation2 + $0xc8] sm:$0xf] %v321
    %326 = vst [vmem:[#allocation2 + $0xd0] sm:$0xf] %v320
    %327 = vst [vmem:[#allocation2 + $0xd8] sm:$0xf] %v319
    %328 = vst [vmem:[#allocation2 + $0xe0] sm:$0xf] %v318
    %329 = vst [vmem:[#allocation2 + $0xe8] sm:$0xf] %v323
    %v330 = vld [vmem:[%s3] sm:$0xff]
    %v331 = vld [vmem:[#allocation2] sm:$0xff]
    %v332 = vld [vmem:[#allocation2 + $0x8] sm:$0xff]
    %v333 = vld [vmem:[#allocation2 + $0x10] sm:$0xff]
    %v334 = vld [vmem:[#allocation2 + $0x18] sm:$0xff]
    %v335 = vld [vmem:[#allocation2 + $0x20] sm:$0xff]
    %v336 = vld [vmem:[#allocation2 + $0x28] sm:$0xff]
    %v337 = vld [vmem:[#allocation2 + $0x30] sm:$0xff]
    %v338 = vld [vmem:[#allocation2 + $0x38] sm:$0xff]
    %v339 = vld [vmem:[#allocation2 + $0x40] sm:$0xff]
    %v340 = vld [vmem:[#allocation2 + $0x48] sm:$0xff]
    %v341 = vld [vmem:[#allocation2 + $0x50] sm:$0xff]
    %v342 = vld [vmem:[#allocation2 + $0x58] sm:$0xff]
    %v343 = vld [vmem:[#allocation2 + $0x60] sm:$0xff]
    %v344 = vld [vmem:[#allocation2 + $0x68] sm:$0xff]
    %v345 = vld [vmem:[#allocation2 + $0x70] sm:$0xff]
    %v346 = vld [vmem:[#allocation2 + $0x78] sm:$0xff]
    %v347 = vld [vmem:[#allocation2 + $0x80] sm:$0xff]
    %v348 = vld [vmem:[#allocation2 + $0x88] sm:$0xff]
    %v349 = vld [vmem:[#allocation2 + $0x90] sm:$0xff]
    %v350 = vld [vmem:[#allocation2 + $0x98] sm:$0xff]
    %v351 = vld [vmem:[#allocation2 + $0xa0] sm:$0xff]
    %v352 = vld [vmem:[#allocation2 + $0xa8] sm:$0xff]
    %v353 = vld [vmem:[#allocation2 + $0xb0] sm:$0xff]
    %v354 = vld [vmem:[#allocation2 + $0xb8] sm:$0xff]
    %v355 = vld [vmem:[#allocation2 + $0xc0] sm:$0xf]
    %v356 = vld [vmem:[#allocation2 + $0xc8] sm:$0xf]
    %v357 = vld [vmem:[#allocation2 + $0xd0] sm:$0xf]
    %v358 = vld [vmem:[#allocation2 + $0xd8] sm:$0xf]
    %v359 = vld [vmem:[#allocation2 + $0xe0] sm:$0xf]
    %v360 = vld [vmem:[#allocation2 + $0xe8] sm:$0xf]
    %v361 = vld [vmem:[%s4] sm:$0xff]
    %363 = vset.pattern.permute.xlu0 0
    %364 = vperm.xlu0 %363, %v361
    %v365 = vpop.permute.xlu0 %364
    %vm367 = vcmask 293888
    %v369 = vsel %vm367, %v330, 0
    %vm371 = vcmask 1043456
    %v373 = vsel %vm371, %v355, 0
    %v376 = vsel %vm371, %v356, 0
    %v379 = vsel %vm371, %v357, 0
    %v382 = vsel %vm371, %v358, 0
    %v385 = vsel %vm371, %v359, 0
    %v388 = vsel %vm371, %v360, 0
    %390 = vmatprep.subr.mxu0 0.0
    %391 = vmatpush1.msra.mxu0 0.0
    %392 = vmatprep.subr.mxu0 0.0
    %393 = vmatpush1.msra.mxu0 0.0
    %394 = vmatprep.subr.mxu0 0.0
    %395 = vmatpush1.msra.mxu0 0.0
    %396 = vmatprep.subr.mxu0 0.0
    %397 = vmatpush1.msra.mxu0 0.0
    %398 = vmatprep.subr.mxu0 0.0
    %399 = vmatpush1.msra.mxu0 0.0
    %400 = vmatprep.subr.mxu0 0.0
    %401 = vmatpush1.msra.mxu0 0.0
    %402 = vmatprep.subr.mxu0 0.0
    %403 = vmatpush1.msra.mxu0 0.0
    %404 = vmatprep.subr.mxu0 0.0
    %405 = vmatpush1.msra.mxu0 0.0
    %406 = vmatprep.subr.mxu0 0.0
    %407 = vmatpush1.msra.mxu0 0.0
    %408 = vmatprep.subr.mxu0 0.0
    %409 = vmatpush1.msra.mxu0 0.0
    %410 = vmatprep.subr.mxu0 0.0
    %411 = vmatpush1.msra.mxu0 0.0
    %412 = vmatprep.subr.mxu0 %v376
    %413 = vmatpush1.msra.mxu0 %v373
    %414 = vmatprep.subr.mxu0 %v350
    %415 = vmatpush1.msra.mxu0 %v349
    %416 = vmatprep.subr.mxu0 %v344
    %417 = vmatpush1.msra.mxu0 %v343
    %418 = vmatprep.subr.mxu0 %v338
    %419 = vmatpush1.msra.mxu0 %v337
    %420 = vmatprep.subr.mxu0 %v332
    %421 = vmatpush1.msra.mxu0 %v331
    %422 = vmatprep.subr.mxu0 0.0
    %423 = vmatpush2.msra.mxu0 0.0
    %424 = vmatprep.subr.mxu0 0.0
    %425 = vmatpush2.msra.mxu0 0.0
    %426 = vmatprep.subr.mxu0 0.0
    %427 = vmatpush2.msra.mxu0 0.0
    %428 = vmatprep.subr.mxu0 0.0
    %429 = vmatpush2.msra.mxu0 0.0
    %430 = vmatprep.subr.mxu0 0.0
    %431 = vmatpush2.msra.mxu0 0.0
    %432 = vmatprep.subr.mxu0 0.0
    %433 = vmatpush2.msra.mxu0 0.0
    %434 = vmatprep.subr.mxu0 0.0
    %435 = vmatpush2.msra.mxu0 0.0
    %436 = vmatprep.subr.mxu0 0.0
    %437 = vmatpush2.msra.mxu0 0.0
    %438 = vmatprep.subr.mxu0 0.0
    %439 = vmatpush2.msra.mxu0 0.0
    %440 = vmatprep.subr.mxu0 0.0
    %441 = vmatpush2.msra.mxu0 0.0
    %442 = vmatprep.subr.mxu0 0.0
    %443 = vmatpush2.msra.mxu0 0.0
    %444 = vmatprep.subr.mxu0 0.0
    %445 = vmatpush2.msra.mxu0 0.0
    %446 = vmatprep.subr.mxu0 0.0
    %447 = vmatpush2.msra.mxu0 0.0
    %448 = vmatprep.subr.mxu0 0.0
    %449 = vmatpush2.msra.mxu0 0.0
    %450 = vmatprep.subr.mxu0 0.0
    %451 = vmatpush2.msra.mxu0 0.0
    %452 = vmatprep.subr.mxu0 0.0
    %453 = vmatpush2.msra.mxu0 0.0
    %454 = vmatprep.mubr.f32.mxu0 0.0
    %455 = vmatmul.mubr.f32.gmra.mxu0 %v369
    %v456 = vpop.f32.mrf.mxu0
    %v457 = vadd.f32 %v365, %v456
    %v458 = vpop.f32.mrf.mxu0
    %v459 = vadd.f32 %v365, %v458
    %460 = vdwg.mxu0
    %461 = vmatprep.subr.mxu0 0.0
    %462 = vmatpush1.msra.mxu0 0.0
    %463 = vmatprep.subr.mxu0 0.0
    %464 = vmatpush1.msra.mxu0 0.0
    %465 = vmatprep.subr.mxu0 0.0
    %466 = vmatpush1.msra.mxu0 0.0
    %467 = vmatprep.subr.mxu0 0.0
    %468 = vmatpush1.msra.mxu0 0.0
    %469 = vmatprep.subr.mxu0 0.0
    %470 = vmatpush1.msra.mxu0 0.0
    %471 = vmatprep.subr.mxu0 0.0
    %472 = vmatpush1.msra.mxu0 0.0
    %473 = vmatprep.subr.mxu0 0.0
    %474 = vmatpush1.msra.mxu0 0.0
    %475 = vmatprep.subr.mxu0 0.0
    %476 = vmatpush1.msra.mxu0 0.0
    %477 = vmatprep.subr.mxu0 0.0
    %478 = vmatpush1.msra.mxu0 0.0
    %479 = vmatprep.subr.mxu0 0.0
    %480 = vmatpush1.msra.mxu0 0.0
    %481 = vmatprep.subr.mxu0 0.0
    %482 = vmatpush1.msra.mxu0 0.0
    %483 = vmatprep.subr.mxu0 %v382
    %484 = vmatpush1.msra.mxu0 %v379
    %485 = vmatprep.subr.mxu0 %v352
    %486 = vmatpush1.msra.mxu0 %v351
    %487 = vmatprep.subr.mxu0 %v346
    %488 = vmatpush1.msra.mxu0 %v345
    %489 = vmatprep.subr.mxu0 %v340
    %490 = vmatpush1.msra.mxu0 %v339
    %491 = vmatprep.subr.mxu0 %v334
    %492 = vmatpush1.msra.mxu0 %v333
    %493 = vmatprep.subr.mxu0 0.0
    %494 = vmatpush2.msra.mxu0 0.0
    %495 = vmatprep.subr.mxu0 0.0
    %496 = vmatpush2.msra.mxu0 0.0
    %497 = vmatprep.subr.mxu0 0.0
    %498 = vmatpush2.msra.mxu0 0.0
    %499 = vmatprep.subr.mxu0 0.0
    %500 = vmatpush2.msra.mxu0 0.0
    %501 = vmatprep.subr.mxu0 0.0
    %502 = vmatpush2.msra.mxu0 0.0
    %503 = vmatprep.subr.mxu0 0.0
    %504 = vmatpush2.msra.mxu0 0.0
    %505 = vmatprep.subr.mxu0 0.0
    %506 = vmatpush2.msra.mxu0 0.0
    %507 = vmatprep.subr.mxu0 0.0
    %508 = vmatpush2.msra.mxu0 0.0
    %509 = vmatprep.subr.mxu0 0.0
    %510 = vmatpush2.msra.mxu0 0.0
    %511 = vmatprep.subr.mxu0 0.0
    %512 = vmatpush2.msra.mxu0 0.0
    %513 = vmatprep.subr.mxu0 0.0
    %514 = vmatpush2.msra.mxu0 0.0
    %515 = vmatprep.subr.mxu0 0.0
    %516 = vmatpush2.msra.mxu0 0.0
    %517 = vmatprep.subr.mxu0 0.0
    %518 = vmatpush2.msra.mxu0 0.0
    %519 = vmatprep.subr.mxu0 0.0
    %520 = vmatpush2.msra.mxu0 0.0
    %521 = vmatprep.subr.mxu0 0.0
    %522 = vmatpush2.msra.mxu0 0.0
    %523 = vmatprep.subr.mxu0 0.0
    %524 = vmatpush2.msra.mxu0 0.0
    %525 = vmatprep.mubr.f32.mxu0 0.0
    %526 = vmatmul.mubr.f32.gmra.mxu0 %v369
    %v527 = vpop.f32.mrf.mxu0
    %v528 = vadd.f32 %v365, %v527
    %v529 = vpop.f32.mrf.mxu0
    %v530 = vadd.f32 %v365, %v529
    %531 = vdwg.mxu0
    %532 = vmatprep.subr.mxu0 0.0
    %533 = vmatpush1.msra.mxu0 0.0
    %534 = vmatprep.subr.mxu0 0.0
    %535 = vmatpush1.msra.mxu0 0.0
    %536 = vmatprep.subr.mxu0 0.0
    %537 = vmatpush1.msra.mxu0 0.0
    %538 = vmatprep.subr.mxu0 0.0
    %539 = vmatpush1.msra.mxu0 0.0
    %540 = vmatprep.subr.mxu0 0.0
    %541 = vmatpush1.msra.mxu0 0.0
    %542 = vmatprep.subr.mxu0 0.0
    %543 = vmatpush1.msra.mxu0 0.0
    %544 = vmatprep.subr.mxu0 0.0
    %545 = vmatpush1.msra.mxu0 0.0
    %546 = vmatprep.subr.mxu0 0.0
    %547 = vmatpush1.msra.mxu0 0.0
    %548 = vmatprep.subr.mxu0 0.0
    %549 = vmatpush1.msra.mxu0 0.0
    %550 = vmatprep.subr.mxu0 0.0
    %551 = vmatpush1.msra.mxu0 0.0
    %552 = vmatprep.subr.mxu0 0.0
    %553 = vmatpush1.msra.mxu0 0.0
    %554 = vmatprep.subr.mxu0 %v388
    %555 = vmatpush1.msra.mxu0 %v385
    %556 = vmatprep.subr.mxu0 %v354
    %557 = vmatpush1.msra.mxu0 %v353
    %558 = vmatprep.subr.mxu0 %v348
    %559 = vmatpush1.msra.mxu0 %v347
    %560 = vmatprep.subr.mxu0 %v342
    %561 = vmatpush1.msra.mxu0 %v341
    %562 = vmatprep.subr.mxu0 %v336
    %563 = vmatpush1.msra.mxu0 %v335
    %564 = vmatprep.subr.mxu0 0.0
    %565 = vmatpush2.msra.mxu0 0.0
    %566 = vmatprep.subr.mxu0 0.0
    %567 = vmatpush2.msra.mxu0 0.0
    %568 = vmatprep.subr.mxu0 0.0
    %569 = vmatpush2.msra.mxu0 0.0
    %570 = vmatprep.subr.mxu0 0.0
    %571 = vmatpush2.msra.mxu0 0.0
    %572 = vmatprep.subr.mxu0 0.0
    %573 = vmatpush2.msra.mxu0 0.0
    %574 = vmatprep.subr.mxu0 0.0
    %575 = vmatpush2.msra.mxu0 0.0
    %576 = vmatprep.subr.mxu0 0.0
    %577 = vmatpush2.msra.mxu0 0.0
    %578 = vmatprep.subr.mxu0 0.0
    %579 = vmatpush2.msra.mxu0 0.0
    %580 = vmatprep.subr.mxu0 0.0
    %581 = vmatpush2.msra.mxu0 0.0
    %582 = vmatprep.subr.mxu0 0.0
    %583 = vmatpush2.msra.mxu0 0.0
    %584 = vmatprep.subr.mxu0 0.0
    %585 = vmatpush2.msra.mxu0 0.0
    %586 = vmatprep.subr.mxu0 0.0
    %587 = vmatpush2.msra.mxu0 0.0
    %588 = vmatprep.subr.mxu0 0.0
    %589 = vmatpush2.msra.mxu0 0.0
    %590 = vmatprep.subr.mxu0 0.0
    %591 = vmatpush2.msra.mxu0 0.0
    %592 = vmatprep.subr.mxu0 0.0
    %593 = vmatpush2.msra.mxu0 0.0
    %594 = vmatprep.subr.mxu0 0.0
    %595 = vmatpush2.msra.mxu0 0.0
    %596 = vmatprep.mubr.f32.mxu0 0.0
    %597 = vmatmul.mubr.f32.gmra.mxu0 %v369
    %v598 = vpop.f32.mrf.mxu0
    %v599 = vadd.f32 %v365, %v598
    %v600 = vpop.f32.mrf.mxu0
    %v601 = vadd.f32 %v365, %v600
    %602 = vdwg.mxu0
    %v603 = vmax.f32 %v457, 0.0
    %v604 = vmax.f32 %v459, 0.0
    %v605 = vmax.f32 %v528, 0.0
    %v606 = vmax.f32 %v530, 0.0
    %v607 = vmax.f32 %v599, 0.0
    %v608 = vmax.f32 %v601, 0.0
    %v610 = vlaneseq
    %v611 = vshrl.u32 %v610, 7
    %v612 = vsub.s32 0, %v611
    %v613 = vrot.slane %v37, %v612
    %v614 = vlaneseq
    %v615 = vshrl.u32 %v614, 7
    %v616 = vsub.s32 1, %v615
    %v617 = vrot.slane %v37, %v616
    %v618 = vlaneseq
    %v619 = vshrl.u32 %v618, 7
    %v620 = vsub.s32 2, %v619
    %v621 = vrot.slane %v37, %v620
    %v622 = vlaneseq
    %v623 = vshrl.u32 %v622, 7
    %v624 = vsub.s32 3, %v623
    %v625 = vrot.slane %v37, %v624
    %v626 = vlaneseq
    %v627 = vshrl.u32 %v626, 7
    %v628 = vsub.s32 4, %v627
    %v629 = vrot.slane %v37, %v628
    %v630 = vlaneseq
    %v631 = vshrl.u32 %v630, 7
    %v632 = vsub.s32 5, %v631
    %v633 = vrot.slane %v37, %v632
    %v640 = vmul.f32 %v603, %v613
    %v641 = vmul.f32 %v604, %v617
    %v642 = vmul.f32 %v605, %v621
    %v643 = vmul.f32 %v606, %v625
    %v644 = vmul.f32 %v607, %v629
    %v645 = vmul.f32 %v608, %v633
    %646 = vrot.lane.b32.xlu0 %v640, 19
    %v647 = vpop.permute.xlu0 %646
    %648 = vrot.lane.b32.xlu0 %v641, 19
    %v649 = vpop.permute.xlu0 %648
    %650 = vrot.lane.b32.xlu0 %v642, 19
    %v651 = vpop.permute.xlu0 %650
    %652 = vrot.lane.b32.xlu0 %v643, 19
    %v653 = vpop.permute.xlu0 %652
    %654 = vrot.lane.b32.xlu0 %v644, 19
    %v655 = vpop.permute.xlu0 %654
    %656 = vrot.lane.b32.xlu0 %v645, 19
    %v657 = vpop.permute.xlu0 %656
    %v658 = vsel %vm64, %v655, %v657
    %v659 = vsel %vm64, %v653, %v655
    %v660 = vsel %vm64, %v651, %v653
    %v661 = vsel %vm64, %v649, %v651
    %v662 = vsel %vm64, %v647, %v649
    %v663 = vsel %vm64, %v657, %v647
    %664 = vst [vmem:[#allocation3] sm:$0xff] %v663
    %665 = vst [vmem:[#allocation3 + $0x8] sm:$0xff] %v662
    %666 = vst [vmem:[#allocation3 + $0x10] sm:$0xff] %v661
    %667 = vst [vmem:[#allocation3 + $0x18] sm:$0xff] %v660
    %668 = vst [vmem:[#allocation3 + $0x20] sm:$0xff] %v659
    %669 = vst [vmem:[#allocation3 + $0x28] sm:$0xff] %v658
    %670 = vrot.lane.b32.xlu0 %v640, 18
    %v671 = vpop.permute.xlu0 %670
    %672 = vrot.lane.b32.xlu0 %v641, 18
    %v673 = vpop.permute.xlu0 %672
    %674 = vrot.lane.b32.xlu0 %v642, 18
    %v675 = vpop.permute.xlu0 %674
    %676 = vrot.lane.b32.xlu0 %v643, 18
    %v677 = vpop.permute.xlu0 %676
    %678 = vrot.lane.b32.xlu0 %v644, 18
    %v679 = vpop.permute.xlu0 %678
    %680 = vrot.lane.b32.xlu0 %v645, 18
    %v681 = vpop.permute.xlu0 %680
    %v682 = vsel %vm89, %v679, %v681
    %v683 = vsel %vm89, %v677, %v679
    %v684 = vsel %vm89, %v675, %v677
    %v685 = vsel %vm89, %v673, %v675
    %v686 = vsel %vm89, %v671, %v673
    %v687 = vsel %vm89, %v681, %v671
    %688 = vst [vmem:[#allocation3 + $0x30] sm:$0xff] %v687
    %689 = vst [vmem:[#allocation3 + $0x38] sm:$0xff] %v686
    %690 = vst [vmem:[#allocation3 + $0x40] sm:$0xff] %v685
    %691 = vst [vmem:[#allocation3 + $0x48] sm:$0xff] %v684
    %692 = vst [vmem:[#allocation3 + $0x50] sm:$0xff] %v683
    %693 = vst [vmem:[#allocation3 + $0x58] sm:$0xff] %v682
    %694 = vrot.lane.b32.xlu0 %v640, 17
    %v695 = vpop.permute.xlu0 %694
    %696 = vrot.lane.b32.xlu0 %v641, 17
    %v697 = vpop.permute.xlu0 %696
    %698 = vrot.lane.b32.xlu0 %v642, 17
    %v699 = vpop.permute.xlu0 %698
    %700 = vrot.lane.b32.xlu0 %v643, 17
    %v701 = vpop.permute.xlu0 %700
    %702 = vrot.lane.b32.xlu0 %v644, 17
    %v703 = vpop.permute.xlu0 %702
    %704 = vrot.lane.b32.xlu0 %v645, 17
    %v705 = vpop.permute.xlu0 %704
    %v706 = vsel %vm132, %v703, %v705
    %v707 = vsel %vm132, %v701, %v703
    %v708 = vsel %vm132, %v699, %v701
    %v709 = vsel %vm132, %v697, %v699
    %v710 = vsel %vm132, %v695, %v697
    %v711 = vsel %vm132, %v705, %v695
    %712 = vst [vmem:[#allocation3 + $0x60] sm:$0xff] %v711
    %713 = vst [vmem:[#allocation3 + $0x68] sm:$0xff] %v710
    %714 = vst [vmem:[#allocation3 + $0x70] sm:$0xff] %v709
    %715 = vst [vmem:[#allocation3 + $0x78] sm:$0xff] %v708
    %716 = vst [vmem:[#allocation3 + $0x80] sm:$0xff] %v707
    %717 = vst [vmem:[#allocation3 + $0x88] sm:$0xff] %v706
    %718 = vrot.lane.b32.xlu0 %v640, 1
    %v719 = vpop.permute.xlu0 %718
    %720 = vrot.lane.b32.xlu0 %v641, 1
    %v721 = vpop.permute.xlu0 %720
    %722 = vrot.lane.b32.xlu0 %v642, 1
    %v723 = vpop.permute.xlu0 %722
    %724 = vrot.lane.b32.xlu0 %v643, 1
    %v725 = vpop.permute.xlu0 %724
    %726 = vrot.lane.b32.xlu0 %v644, 1
    %v727 = vpop.permute.xlu0 %726
    %728 = vrot.lane.b32.xlu0 %v645, 1
    %v729 = vpop.permute.xlu0 %728
    %v730 = vsel %vm157, %v727, %v729
    %v731 = vsel %vm157, %v725, %v727
    %v732 = vsel %vm157, %v723, %v725
    %v733 = vsel %vm157, %v721, %v723
    %v734 = vsel %vm157, %v719, %v721
    %v735 = vsel %vm157, %v729, %v719
    %736 = vst [vmem:[#allocation3 + $0x90] sm:$0xff] %v735
    %737 = vst [vmem:[#allocation3 + $0x98] sm:$0xff] %v734
    %738 = vst [vmem:[#allocation3 + $0xa0] sm:$0xff] %v733
    %739 = vst [vmem:[#allocation3 + $0xa8] sm:$0xff] %v732
    %740 = vst [vmem:[#allocation3 + $0xb0] sm:$0xff] %v731
    %741 = vst [vmem:[#allocation3 + $0xb8] sm:$0xff] %v730
    %742 = vst [vmem:[#allocation3 + $0xc0] sm:$0xff] %v640
    %743 = vst [vmem:[#allocation3 + $0xc8] sm:$0xff] %v641
    %744 = vst [vmem:[#allocation3 + $0xd0] sm:$0xff] %v642
    %745 = vst [vmem:[#allocation3 + $0xd8] sm:$0xff] %v643
    %746 = vst [vmem:[#allocation3 + $0xe0] sm:$0xff] %v644
    %747 = vst [vmem:[#allocation3 + $0xe8] sm:$0xff] %v645
    %748 = vrot.lane.b32.xlu0 %v640, 127
    %v749 = vpop.permute.xlu0 %748
    %750 = vrot.lane.b32.xlu0 %v641, 127
    %v751 = vpop.permute.xlu0 %750
    %752 = vrot.lane.b32.xlu0 %v642, 127
    %v753 = vpop.permute.xlu0 %752
    %754 = vrot.lane.b32.xlu0 %v643, 127
    %v755 = vpop.permute.xlu0 %754
    %756 = vrot.lane.b32.xlu0 %v644, 127
    %v757 = vpop.permute.xlu0 %756
    %758 = vrot.lane.b32.xlu0 %v645, 127
    %v759 = vpop.permute.xlu0 %758
    %v760 = vsel %vm206, %v757, %v759
    %v761 = vsel %vm206, %v755, %v757
    %v762 = vsel %vm206, %v753, %v755
    %v763 = vsel %vm206, %v751, %v753
    %v764 = vsel %vm206, %v749, %v751
    %v765 = vsel %vm206, %v759, %v749
    %766 = vst [vmem:[#allocation3 + $0xf0] sm:$0xff] %v764
    %767 = vst [vmem:[#allocation3 + $0xf8] sm:$0xff] %v763
    %768 = vst [vmem:[#allocation3 + $0x100] sm:$0xff] %v762
    %769 = vst [vmem:[#allocation3 + $0x108] sm:$0xff] %v761
    %770 = vst [vmem:[#allocation3 + $0x110] sm:$0xff] %v760
    %771 = vst [vmem:[#allocation3 + $0x118] sm:$0xff] %v765
    %772 = vrot.lane.b32.xlu0 %v640, 111
    %v773 = vpop.permute.xlu0 %772
    %774 = vrot.lane.b32.xlu0 %v641, 111
    %v775 = vpop.permute.xlu0 %774
    %776 = vrot.lane.b32.xlu0 %v642, 111
    %v777 = vpop.permute.xlu0 %776
    %778 = vrot.lane.b32.xlu0 %v643, 111
    %v779 = vpop.permute.xlu0 %778
    %780 = vrot.lane.b32.xlu0 %v644, 111
    %v781 = vpop.permute.xlu0 %780
    %782 = vrot.lane.b32.xlu0 %v645, 111
    %v783 = vpop.permute.xlu0 %782
    %v784 = vsel %vm249, %v781, %v783
    %v785 = vsel %vm249, %v779, %v781
    %v786 = vsel %vm249, %v777, %v779
    %v787 = vsel %vm249, %v775, %v777
    %v788 = vsel %vm249, %v773, %v775
    %v789 = vsel %vm249, %v783, %v773
    %790 = vst [vmem:[#allocation3 + $0x120] sm:$0xff] %v788
    %791 = vst [vmem:[#allocation3 + $0x128] sm:$0xff] %v787
    %792 = vst [vmem:[#allocation3 + $0x130] sm:$0xff] %v786
    %793 = vst [vmem:[#allocation3 + $0x138] sm:$0xff] %v785
    %794 = vst [vmem:[#allocation3 + $0x140] sm:$0xff] %v784
    %795 = vst [vmem:[#allocation3 + $0x148] sm:$0xff] %v789
    %796 = vrot.lane.b32.xlu0 %v640, 110
    %v797 = vpop.permute.xlu0 %796
    %798 = vrot.lane.b32.xlu0 %v641, 110
    %v799 = vpop.permute.xlu0 %798
    %800 = vrot.lane.b32.xlu0 %v642, 110
    %v801 = vpop.permute.xlu0 %800
    %802 = vrot.lane.b32.xlu0 %v643, 110
    %v803 = vpop.permute.xlu0 %802
    %804 = vrot.lane.b32.xlu0 %v644, 110
    %v805 = vpop.permute.xlu0 %804
    %806 = vrot.lane.b32.xlu0 %v645, 110
    %v807 = vpop.permute.xlu0 %806
    %v808 = vsel %vm274, %v805, %v807
    %v809 = vsel %vm274, %v803, %v805
    %v810 = vsel %vm274, %v801, %v803
    %v811 = vsel %vm274, %v799, %v801
    %v812 = vsel %vm274, %v797, %v799
    %v813 = vsel %vm274, %v807, %v797
    %814 = vst [vmem:[#allocation3 + $0x150] sm:$0xff] %v812
    %815 = vst [vmem:[#allocation3 + $0x158] sm:$0xff] %v811
    %816 = vst [vmem:[#allocation3 + $0x160] sm:$0xff] %v810
    %817 = vst [vmem:[#allocation3 + $0x168] sm:$0xff] %v809
    %818 = vst [vmem:[#allocation3 + $0x170] sm:$0xff] %v808
    %819 = vst [vmem:[#allocation3 + $0x178] sm:$0xff] %v813
    %820 = vrot.lane.b32.xlu0 %v640, 109
    %v821 = vpop.permute.xlu0 %820
    %822 = vrot.lane.b32.xlu0 %v641, 109
    %v823 = vpop.permute.xlu0 %822
    %824 = vrot.lane.b32.xlu0 %v642, 109
    %v825 = vpop.permute.xlu0 %824
    %826 = vrot.lane.b32.xlu0 %v643, 109
    %v827 = vpop.permute.xlu0 %826
    %828 = vrot.lane.b32.xlu0 %v644, 109
    %v829 = vpop.permute.xlu0 %828
    %830 = vrot.lane.b32.xlu0 %v645, 109
    %v831 = vpop.permute.xlu0 %830
    %v832 = vsel %vm317, %v829, %v831
    %v833 = vsel %vm317, %v827, %v829
    %v834 = vsel %vm317, %v825, %v827
    %v835 = vsel %vm317, %v823, %v825
    %v836 = vsel %vm317, %v821, %v823
    %v837 = vsel %vm317, %v831, %v821
    %838 = vst [vmem:[#allocation3 + $0x180] sm:$0xff] %v836
    %839 = vst [vmem:[#allocation3 + $0x188] sm:$0xff] %v835
    %840 = vst [vmem:[#allocation3 + $0x190] sm:$0xff] %v834
    %841 = vst [vmem:[#allocation3 + $0x198] sm:$0xff] %v833
    %842 = vst [vmem:[#allocation3 + $0x1a0] sm:$0xff] %v832
    %843 = vst [vmem:[#allocation3 + $0x1a8] sm:$0xff] %v837
    %v844 = vld [vmem:[%s5] sm:$0xf]
    %v845 = vld [vmem:[#allocation3] sm:$0xff]
    %v846 = vld [vmem:[#allocation3 + $0x8] sm:$0xff]
    %v847 = vld [vmem:[#allocation3 + $0x10] sm:$0xff]
    %v848 = vld [vmem:[#allocation3 + $0x18] sm:$0xff]
    %v849 = vld [vmem:[#allocation3 + $0x20] sm:$0xff]
    %v850 = vld [vmem:[#allocation3 + $0x28] sm:$0xff]
    %v851 = vld [vmem:[#allocation3 + $0x30] sm:$0xff]
    %v852 = vld [vmem:[#allocation3 + $0x38] sm:$0xff]
    %v853 = vld [vmem:[#allocation3 + $0x40] sm:$0xff]
    %v854 = vld [vmem:[#allocation3 + $0x48] sm:$0xff]
    %v855 = vld [vmem:[#allocation3 + $0x50] sm:$0xff]
    %v856 = vld [vmem:[#allocation3 + $0x58] sm:$0xff]
    %v857 = vld [vmem:[#allocation3 + $0x60] sm:$0xff]
    %v858 = vld [vmem:[#allocation3 + $0x68] sm:$0xff]
    %v859 = vld [vmem:[#allocation3 + $0x70] sm:$0xff]
    %v860 = vld [vmem:[#allocation3 + $0x78] sm:$0xff]
    %v861 = vld [vmem:[#allocation3 + $0x80] sm:$0xff]
    %v862 = vld [vmem:[#allocation3 + $0x88] sm:$0xff]
    %v863 = vld [vmem:[#allocation3 + $0x90] sm:$0xff]
    %v864 = vld [vmem:[#allocation3 + $0x98] sm:$0xff]
    %v865 = vld [vmem:[#allocation3 + $0xa0] sm:$0xff]
    %v866 = vld [vmem:[#allocation3 + $0xa8] sm:$0xff]
    %v867 = vld [vmem:[#allocation3 + $0xb0] sm:$0xff]
    %v868 = vld [vmem:[#allocation3 + $0xb8] sm:$0xff]
    %v869 = vld [vmem:[#allocation3 + $0xc0] sm:$0xff]
    %v870 = vld [vmem:[#allocation3 + $0xc8] sm:$0xff]
    %v871 = vld [vmem:[#allocation3 + $0xd0] sm:$0xff]
    %v872 = vld [vmem:[#allocation3 + $0xd8] sm:$0xff]
    %v873 = vld [vmem:[#allocation3 + $0xe0] sm:$0xff]
    %v874 = vld [vmem:[#allocation3 + $0xe8] sm:$0xff]
    %v875 = vld [vmem:[#allocation3 + $0xf0] sm:$0xff]
    %v876 = vld [vmem:[#allocation3 + $0xf8] sm:$0xff]
    %v877 = vld [vmem:[#allocation3 + $0x100] sm:$0xff]
    %v878 = vld [vmem:[#allocation3 + $0x108] sm:$0xff]
    %v879 = vld [vmem:[#allocation3 + $0x110] sm:$0xff]
    %v880 = vld [vmem:[#allocation3 + $0x118] sm:$0xff]
    %v881 = vld [vmem:[#allocation3 + $0x120] sm:$0xff]
    %v882 = vld [vmem:[#allocation3 + $0x128] sm:$0xff]
    %v883 = vld [vmem:[#allocation3 + $0x130] sm:$0xff]
    %v884 = vld [vmem:[#allocation3 + $0x138] sm:$0xff]
    %v885 = vld [vmem:[#allocation3 + $0x140] sm:$0xff]
    %v886 = vld [vmem:[#allocation3 + $0x148] sm:$0xff]
    %v887 = vld [vmem:[#allocation3 + $0x150] sm:$0xff]
    %v888 = vld [vmem:[#allocation3 + $0x158] sm:$0xff]
    %v889 = vld [vmem:[#allocation3 + $0x160] sm:$0xff]
    %v890 = vld [vmem:[#allocation3 + $0x168] sm:$0xff]
    %v891 = vld [vmem:[#allocation3 + $0x170] sm:$0xff]
    %v892 = vld [vmem:[#allocation3 + $0x178] sm:$0xff]
    %v893 = vld [vmem:[#allocation3 + $0x180] sm:$0xff]
    %v894 = vld [vmem:[#allocation3 + $0x188] sm:$0xff]
    %v895 = vld [vmem:[#allocation3 + $0x190] sm:$0xff]
    %v896 = vld [vmem:[#allocation3 + $0x198] sm:$0xff]
    %v897 = vld [vmem:[#allocation3 + $0x1a0] sm:$0xff]
    %v898 = vld [vmem:[#allocation3 + $0x1a8] sm:$0xff]
    %v899 = vld [vmem:[%s6] sm:$0xf]
    %901 = vset.pattern.permute.xlu0 0
    %902 = vperm.xlu0 %901, %v899
    %v903 = vpop.permute.xlu0 %902
    %vm905 = vcmask 588800
    %v907 = vsel %vm905, %v844, 0
    %909 = vmatprep.subr.mxu0 0.0
    %910 = vmatpush1.msra.mxu0 0.0
    %911 = vmatprep.subr.mxu0 0.0
    %912 = vmatpush1.msra.mxu0 0.0
    %913 = vmatprep.subr.mxu0 0.0
    %914 = vmatpush1.msra.mxu0 0.0
    %915 = vmatprep.subr.mxu0 0.0
    %916 = vmatpush1.msra.mxu0 0.0
    %917 = vmatprep.subr.mxu0 0.0
    %918 = vmatpush1.msra.mxu0 0.0
    %919 = vmatprep.subr.mxu0 0.0
    %920 = vmatpush1.msra.mxu0 0.0
    %921 = vmatprep.subr.mxu0 0.0
    %922 = vmatpush1.msra.mxu0 0.0
    %923 = vmatprep.subr.mxu0 %v894
    %924 = vmatpush1.msra.mxu0 %v893
    %925 = vmatprep.subr.mxu0 %v888
    %926 = vmatpush1.msra.mxu0 %v887
    %927 = vmatprep.subr.mxu0 %v882
    %928 = vmatpush1.msra.mxu0 %v881
    %929 = vmatprep.subr.mxu0 %v876
    %930 = vmatpush1.msra.mxu0 %v875
    %931 = vmatprep.subr.mxu0 %v870
    %932 = vmatpush1.msra.mxu0 %v869
    %933 = vmatprep.subr.mxu0 %v864
    %934 = vmatpush1.msra.mxu0 %v863
    %935 = vmatprep.subr.mxu0 %v858
    %936 = vmatpush1.msra.mxu0 %v857
    %937 = vmatprep.subr.mxu0 %v852
    %938 = vmatpush1.msra.mxu0 %v851
    %939 = vmatprep.subr.mxu0 %v846
    %940 = vmatpush1.msra.mxu0 %v845
    %941 = vmatprep.subr.mxu0 0.0
    %942 = vmatpush2.msra.mxu0 0.0
    %943 = vmatprep.subr.mxu0 0.0
    %944 = vmatpush2.msra.mxu0 0.0
    %945 = vmatprep.subr.mxu0 0.0
    %946 = vmatpush2.msra.mxu0 0.0
    %947 = vmatprep.subr.mxu0 0.0
    %948 = vmatpush2.msra.mxu0 0.0
    %949 = vmatprep.subr.mxu0 0.0
    %950 = vmatpush2.msra.mxu0 0.0
    %951 = vmatprep.subr.mxu0 0.0
    %952 = vmatpush2.msra.mxu0 0.0
    %953 = vmatprep.subr.mxu0 0.0
    %954 = vmatpush2.msra.mxu0 0.0
    %955 = vmatprep.subr.mxu0 0.0
    %956 = vmatpush2.msra.mxu0 0.0
    %957 = vmatprep.subr.mxu0 0.0
    %958 = vmatpush2.msra.mxu0 0.0
    %959 = vmatprep.subr.mxu0 0.0
    %960 = vmatpush2.msra.mxu0 0.0
    %961 = vmatprep.subr.mxu0 0.0
    %962 = vmatpush2.msra.mxu0 0.0
    %963 = vmatprep.subr.mxu0 0.0
    %964 = vmatpush2.msra.mxu0 0.0
    %965 = vmatprep.subr.mxu0 0.0
    %966 = vmatpush2.msra.mxu0 0.0
    %967 = vmatprep.subr.mxu0 0.0
    %968 = vmatpush2.msra.mxu0 0.0
    %969 = vmatprep.subr.mxu0 0.0
    %970 = vmatpush2.msra.mxu0 0.0
    %971 = vmatprep.subr.mxu0 0.0
    %972 = vmatpush2.msra.mxu0 0.0
    %973 = vmatprep.mubr.f32.mxu0 0.0
    %974 = vmatmul.mubr.f32.gmra.mxu0 %v907
    %v975 = vpop.f32.mrf.mxu0
    %v976 = vadd.f32 %v903, %v975
    %v977 = vpop.f32.mrf.mxu0
    %v978 = vadd.f32 %v903, %v977
    %979 = vdwg.mxu0
    %980 = vmatprep.subr.mxu0 0.0
    %981 = vmatpush1.msra.mxu0 0.0
    %982 = vmatprep.subr.mxu0 0.0
    %983 = vmatpush1.msra.mxu0 0.0
    %984 = vmatprep.subr.mxu0 0.0
    %985 = vmatpush1.msra.mxu0 0.0
    %986 = vmatprep.subr.mxu0 0.0
    %987 = vmatpush1.msra.mxu0 0.0
    %988 = vmatprep.subr.mxu0 0.0
    %989 = vmatpush1.msra.mxu0 0.0
    %990 = vmatprep.subr.mxu0 0.0
    %991 = vmatpush1.msra.mxu0 0.0
    %992 = vmatprep.subr.mxu0 0.0
    %993 = vmatpush1.msra.mxu0 0.0
    %994 = vmatprep.subr.mxu0 %v896
    %995 = vmatpush1.msra.mxu0 %v895
    %996 = vmatprep.subr.mxu0 %v890
    %997 = vmatpush1.msra.mxu0 %v889
    %998 = vmatprep.subr.mxu0 %v884
    %999 = vmatpush1.msra.mxu0 %v883
    %1000 = vmatprep.subr.mxu0 %v878
    %1001 = vmatpush1.msra.mxu0 %v877
    %1002 = vmatprep.subr.mxu0 %v872
    %1003 = vmatpush1.msra.mxu0 %v871
    %1004 = vmatprep.subr.mxu0 %v866
    %1005 = vmatpush1.msra.mxu0 %v865
    %1006 = vmatprep.subr.mxu0 %v860
    %1007 = vmatpush1.msra.mxu0 %v859
    %1008 = vmatprep.subr.mxu0 %v854
    %1009 = vmatpush1.msra.mxu0 %v853
    %1010 = vmatprep.subr.mxu0 %v848
    %1011 = vmatpush1.msra.mxu0 %v847
    %1012 = vmatprep.subr.mxu0 0.0
    %1013 = vmatpush2.msra.mxu0 0.0
    %1014 = vmatprep.subr.mxu0 0.0
    %1015 = vmatpush2.msra.mxu0 0.0
    %1016 = vmatprep.subr.mxu0 0.0
    %1017 = vmatpush2.msra.mxu0 0.0
    %1018 = vmatprep.subr.mxu0 0.0
    %1019 = vmatpush2.msra.mxu0 0.0
    %1020 = vmatprep.subr.mxu0 0.0
    %1021 = vmatpush2.msra.mxu0 0.0
    %1022 = vmatprep.subr.mxu0 0.0
    %1023 = vmatpush2.msra.mxu0 0.0
    %1024 = vmatprep.subr.mxu0 0.0
    %1025 = vmatpush2.msra.mxu0 0.0
    %1026 = vmatprep.subr.mxu0 0.0
    %1027 = vmatpush2.msra.mxu0 0.0
    %1028 = vmatprep.subr.mxu0 0.0
    %1029 = vmatpush2.msra.mxu0 0.0
    %1030 = vmatprep.subr.mxu0 0.0
    %1031 = vmatpush2.msra.mxu0 0.0
    %1032 = vmatprep.subr.mxu0 0.0
    %1033 = vmatpush2.msra.mxu0 0.0
    %1034 = vmatprep.subr.mxu0 0.0
    %1035 = vmatpush2.msra.mxu0 0.0
    %1036 = vmatprep.subr.mxu0 0.0
    %1037 = vmatpush2.msra.mxu0 0.0
    %1038 = vmatprep.subr.mxu0 0.0
    %1039 = vmatpush2.msra.mxu0 0.0
    %1040 = vmatprep.subr.mxu0 0.0
    %1041 = vmatpush2.msra.mxu0 0.0
    %1042 = vmatprep.subr.mxu0 0.0
    %1043 = vmatpush2.msra.mxu0 0.0
    %1044 = vmatprep.mubr.f32.mxu0 0.0
    %1045 = vmatmul.mubr.f32.gmra.mxu0 %v907
    %v1046 = vpop.f32.mrf.mxu0
    %v1047 = vadd.f32 %v903, %v1046
    %v1048 = vpop.f32.mrf.mxu0
    %v1049 = vadd.f32 %v903, %v1048
    %1050 = vdwg.mxu0
    %1051 = vmatprep.subr.mxu0 0.0
    %1052 = vmatpush1.msra.mxu0 0.0
    %1053 = vmatprep.subr.mxu0 0.0
    %1054 = vmatpush1.msra.mxu0 0.0
    %1055 = vmatprep.subr.mxu0 0.0
    %1056 = vmatpush1.msra.mxu0 0.0
    %1057 = vmatprep.subr.mxu0 0.0
    %1058 = vmatpush1.msra.mxu0 0.0
    %1059 = vmatprep.subr.mxu0 0.0
    %1060 = vmatpush1.msra.mxu0 0.0
    %1061 = vmatprep.subr.mxu0 0.0
    %1062 = vmatpush1.msra.mxu0 0.0
    %1063 = vmatprep.subr.mxu0 0.0
    %1064 = vmatpush1.msra.mxu0 0.0
    %1065 = vmatprep.subr.mxu0 %v898
    %1066 = vmatpush1.msra.mxu0 %v897
    %1067 = vmatprep.subr.mxu0 %v892
    %1068 = vmatpush1.msra.mxu0 %v891
    %1069 = vmatprep.subr.mxu0 %v886
    %1070 = vmatpush1.msra.mxu0 %v885
    %1071 = vmatprep.subr.mxu0 %v880
    %1072 = vmatpush1.msra.mxu0 %v879
    %1073 = vmatprep.subr.mxu0 %v874
    %1074 = vmatpush1.msra.mxu0 %v873
    %1075 = vmatprep.subr.mxu0 %v868
    %1076 = vmatpush1.msra.mxu0 %v867
    %1077 = vmatprep.subr.mxu0 %v862
    %1078 = vmatpush1.msra.mxu0 %v861
    %1079 = vmatprep.subr.mxu0 %v856
    %1080 = vmatpush1.msra.mxu0 %v855
    %1081 = vmatprep.subr.mxu0 %v850
    %1082 = vmatpush1.msra.mxu0 %v849
    %1083 = vmatprep.subr.mxu0 0.0
    %1084 = vmatpush2.msra.mxu0 0.0
    %1085 = vmatprep.subr.mxu0 0.0
    %1086 = vmatpush2.msra.mxu0 0.0
    %1087 = vmatprep.subr.mxu0 0.0
    %1088 = vmatpush2.msra.mxu0 0.0
    %1089 = vmatprep.subr.mxu0 0.0
    %1090 = vmatpush2.msra.mxu0 0.0
    %1091 = vmatprep.subr.mxu0 0.0
    %1092 = vmatpush2.msra.mxu0 0.0
    %1093 = vmatprep.subr.mxu0 0.0
    %1094 = vmatpush2.msra.mxu0 0.0
    %1095 = vmatprep.subr.mxu0 0.0
    %1096 = vmatpush2.msra.mxu0 0.0
    %1097 = vmatprep.subr.mxu0 0.0
    %1098 = vmatpush2.msra.mxu0 0.0
    %1099 = vmatprep.subr.mxu0 0.0
    %1100 = vmatpush2.msra.mxu0 0.0
    %1101 = vmatprep.subr.mxu0 0.0
    %1102 = vmatpush2.msra.mxu0 0.0
    %1103 = vmatprep.subr.mxu0 0.0
    %1104 = vmatpush2.msra.mxu0 0.0
    %1105 = vmatprep.subr.mxu0 0.0
    %1106 = vmatpush2.msra.mxu0 0.0
    %1107 = vmatprep.subr.mxu0 0.0
    %1108 = vmatpush2.msra.mxu0 0.0
    %1109 = vmatprep.subr.mxu0 0.0
    %1110 = vmatpush2.msra.mxu0 0.0
    %1111 = vmatprep.subr.mxu0 0.0
    %1112 = vmatpush2.msra.mxu0 0.0
    %1113 = vmatprep.subr.mxu0 0.0
    %1114 = vmatpush2.msra.mxu0 0.0
    %1115 = vmatprep.mubr.f32.mxu0 0.0
    %1116 = vmatmul.mubr.f32.gmra.mxu0 %v907
    %v1117 = vpop.f32.mrf.mxu0
    %v1118 = vadd.f32 %v903, %v1117
    %v1119 = vpop.f32.mrf.mxu0
    %v1120 = vadd.f32 %v903, %v1119
    %1121 = vdwg.mxu0
    %v1122 = vld [vmem:[%s1] sm:$0xff]
    %v1123 = vld [vmem:[%s1 + $0x8] sm:$0xff]
    %v1124 = vld [vmem:[%s1 + $0x10] sm:$0xff]
    %v1128 = vcombine.high %v1122, %v1122
    %v1129 = vcombine.high %v1123, %v1123
    %v1130 = vcombine.high %v1124, %v1124
    %v1134 = vsub.f32 %v976, %v1122
    %v1135 = vsub.f32 %v978, %v1128
    %v1136 = vsub.f32 %v1047, %v1123
    %v1137 = vsub.f32 %v1049, %v1129
    %v1138 = vsub.f32 %v1118, %v1124
    %v1139 = vsub.f32 %v1120, %v1130
    %v1140 = vmul.f32 %v1134, %v613
    %v1141 = vmul.f32 %v1135, %v617
    %v1142 = vmul.f32 %v1136, %v621
    %v1143 = vmul.f32 %v1137, %v625
    %v1144 = vmul.f32 %v1138, %v629
    %v1145 = vmul.f32 %v1139, %v633
    %v1146 = vmul.f32 %v1140, %v1140
    %v1147 = vmul.f32 %v1141, %v1141
    %v1148 = vmul.f32 %v1142, %v1142
    %v1149 = vmul.f32 %v1143, %v1143
    %v1150 = vmul.f32 %v1144, %v1144
    %v1151 = vmul.f32 %v1145, %v1145
    %v1152 = vsel %vm371, %v1146, 0.0
    %v1153 = vsel %vm371, %v1147, 0.0
    %v1154 = vadd.f32 %v1152, %v1153
    %v1155 = vsel %vm371, %v1148, 0.0
    %v1156 = vadd.f32 %v1154, %v1155
    %v1157 = vsel %vm371, %v1149, 0.0
    %v1158 = vadd.f32 %v1156, %v1157
    %v1159 = vsel %vm371, %v1150, 0.0
    %v1160 = vadd.f32 %v1158, %v1159
    %v1161 = vsel %vm371, %v1151, 0.0
    %v1162 = vadd.f32 %v1160, %v1161
    %1163 = vadd.xlane.f32.xlu0 %v1162
    %v1164 = vpop.xlane.xlu0 %1163
    %v1165 = vrot.slane %v1164, 4
    %v1166 = vadd.f32 %v1164, %v1165
    %v1167 = vrot.slane %v1166, 2
    %v1168 = vadd.f32 %v1166, %v1167
    %v1169 = vrot.slane %v1168, 1
    %v1170 = vadd.f32 %v1168, %v1169
    %s1171 = vtos %v1170
    %s1172 = smul.f32 %s1171, 0.00048828125
    %s1173 = scalar_lea.smem [#allocation4], 0
    %1174 = sst [smem:[%s1173]] %s1172
    %v1175 = vmul.f32 %v1140, 0.0009765625
    %v1176 = vmul.f32 %v1141, 0.0009765625
    %v1177 = vmul.f32 %v1142, 0.0009765625
    %v1178 = vmul.f32 %v1143, 0.0009765625
    %v1179 = vmul.f32 %v1144, 0.0009765625
    %v1180 = vmul.f32 %v1145, 0.0009765625
    %v1181 = vsel %vm371, %v1175, 0.0
    %v1182 = vsel %vm371, %v1176, 0.0
    %v1183 = vadd.f32 %v1181, %v1182
    %v1184 = vsel %vm371, %v1177, 0.0
    %v1185 = vadd.f32 %v1183, %v1184
    %v1186 = vsel %vm371, %v1178, 0.0
    %v1187 = vadd.f32 %v1185, %v1186
    %v1188 = vsel %vm371, %v1179, 0.0
    %v1189 = vadd.f32 %v1187, %v1188
    %v1190 = vsel %vm371, %v1180, 0.0
    %v1191 = vadd.f32 %v1189, %v1190
    %1192 = vadd.xlane.f32.xlu0 %v1191
    %v1193 = vpop.xlane.xlu0 %1192
    %vm1194 = vcmask 3072
    %1195 = vst.msk [vmem:[%s12] sm:$0xf] %vm1194, %v1193
    %v1196 = vld [vmem:[#allocation3] sm:$0xff]
    %v1197 = vld [vmem:[#allocation3 + $0x8] sm:$0xff]
    %v1198 = vld [vmem:[#allocation3 + $0x10] sm:$0xff]
    %v1199 = vld [vmem:[#allocation3 + $0x18] sm:$0xff]
    %v1200 = vld [vmem:[#allocation3 + $0x20] sm:$0xff]
    %v1201 = vld [vmem:[#allocation3 + $0x28] sm:$0xff]
    %v1202 = vld [vmem:[#allocation3 + $0x30] sm:$0xff]
    %v1203 = vld [vmem:[#allocation3 + $0x38] sm:$0xff]
    %v1204 = vld [vmem:[#allocation3 + $0x40] sm:$0xff]
    %v1205 = vld [vmem:[#allocation3 + $0x48] sm:$0xff]
    %v1206 = vld [vmem:[#allocation3 + $0x50] sm:$0xff]
    %v1207 = vld [vmem:[#allocation3 + $0x58] sm:$0xff]
    %v1208 = vld [vmem:[#allocation3 + $0x60] sm:$0xff]
    %v1209 = vld [vmem:[#allocation3 + $0x68] sm:$0xff]
    %v1210 = vld [vmem:[#allocation3 + $0x70] sm:$0xff]
    %v1211 = vld [vmem:[#allocation3 + $0x78] sm:$0xff]
    %v1212 = vld [vmem:[#allocation3 + $0x80] sm:$0xff]
    %v1213 = vld [vmem:[#allocation3 + $0x88] sm:$0xff]
    %v1214 = vld [vmem:[#allocation3 + $0x90] sm:$0xff]
    %v1215 = vld [vmem:[#allocation3 + $0x98] sm:$0xff]
    %v1216 = vld [vmem:[#allocation3 + $0xa0] sm:$0xff]
    %v1217 = vld [vmem:[#allocation3 + $0xa8] sm:$0xff]
    %v1218 = vld [vmem:[#allocation3 + $0xb0] sm:$0xff]
    %v1219 = vld [vmem:[#allocation3 + $0xb8] sm:$0xff]
    %v1220 = vld [vmem:[#allocation3 + $0xc0] sm:$0xff]
    %v1221 = vld [vmem:[#allocation3 + $0xc8] sm:$0xff]
    %v1222 = vld [vmem:[#allocation3 + $0xd0] sm:$0xff]
    %v1223 = vld [vmem:[#allocation3 + $0xd8] sm:$0xff]
    %v1224 = vld [vmem:[#allocation3 + $0xe0] sm:$0xff]
    %v1225 = vld [vmem:[#allocation3 + $0xe8] sm:$0xff]
    %v1226 = vld [vmem:[#allocation3 + $0xf0] sm:$0xff]
    %v1227 = vld [vmem:[#allocation3 + $0xf8] sm:$0xff]
    %v1228 = vld [vmem:[#allocation3 + $0x100] sm:$0xff]
    %v1229 = vld [vmem:[#allocation3 + $0x108] sm:$0xff]
    %v1230 = vld [vmem:[#allocation3 + $0x110] sm:$0xff]
    %v1231 = vld [vmem:[#allocation3 + $0x118] sm:$0xff]
    %v1232 = vld [vmem:[#allocation3 + $0x120] sm:$0xff]
    %v1233 = vld [vmem:[#allocation3 + $0x128] sm:$0xff]
    %v1234 = vld [vmem:[#allocation3 + $0x130] sm:$0xff]
    %v1235 = vld [vmem:[#allocation3 + $0x138] sm:$0xff]
    %v1236 = vld [vmem:[#allocation3 + $0x140] sm:$0xff]
    %v1237 = vld [vmem:[#allocation3 + $0x148] sm:$0xff]
    %v1238 = vld [vmem:[#allocation3 + $0x150] sm:$0xff]
    %v1239 = vld [vmem:[#allocation3 + $0x158] sm:$0xff]
    %v1240 = vld [vmem:[#allocation3 + $0x160] sm:$0xff]
    %v1241 = vld [vmem:[#allocation3 + $0x168] sm:$0xff]
    %v1242 = vld [vmem:[#allocation3 + $0x170] sm:$0xff]
    %v1243 = vld [vmem:[#allocation3 + $0x178] sm:$0xff]
    %v1244 = vld [vmem:[#allocation3 + $0x180] sm:$0xff]
    %v1245 = vld [vmem:[#allocation3 + $0x188] sm:$0xff]
    %v1246 = vld [vmem:[#allocation3 + $0x190] sm:$0xff]
    %v1247 = vld [vmem:[#allocation3 + $0x198] sm:$0xff]
    %v1248 = vld [vmem:[#allocation3 + $0x1a0] sm:$0xff]
    %v1249 = vld [vmem:[#allocation3 + $0x1a8] sm:$0xff]
    %1250 = vmatprep.subr.mxu0 0.0
    %1251 = vmatpush1.xpose.msra.mxu0 0.0
    %1252 = vmatprep.subr.mxu0 0.0
    %1253 = vmatpush1.xpose.msra.mxu0 0.0
    %1254 = vmatprep.subr.mxu0 0.0
    %1255 = vmatpush1.xpose.msra.mxu0 0.0
    %1256 = vmatprep.subr.mxu0 0.0
    %1257 = vmatpush1.xpose.msra.mxu0 0.0
    %1258 = vmatprep.subr.mxu0 0.0
    %1259 = vmatpush1.xpose.msra.mxu0 0.0
    %1260 = vmatprep.subr.mxu0 0.0
    %1261 = vmatpush1.xpose.msra.mxu0 0.0
    %1262 = vmatprep.subr.mxu0 0.0
    %1263 = vmatpush1.xpose.msra.mxu0 0.0
    %1264 = vmatprep.subr.mxu0 %v1245
    %1265 = vmatpush1.xpose.msra.mxu0 %v1244
    %1266 = vmatprep.subr.mxu0 %v1239
    %1267 = vmatpush1.xpose.msra.mxu0 %v1238
    %1268 = vmatprep.subr.mxu0 %v1233
    %1269 = vmatpush1.xpose.msra.mxu0 %v1232
    %1270 = vmatprep.subr.mxu0 %v1227
    %1271 = vmatpush1.xpose.msra.mxu0 %v1226
    %1272 = vmatprep.subr.mxu0 %v1221
    %1273 = vmatpush1.xpose.msra.mxu0 %v1220
    %1274 = vmatprep.subr.mxu0 %v1215
    %1275 = vmatpush1.xpose.msra.mxu0 %v1214
    %1276 = vmatprep.subr.mxu0 %v1209
    %1277 = vmatpush1.xpose.msra.mxu0 %v1208
    %1278 = vmatprep.subr.mxu0 %v1203
    %1279 = vmatpush1.xpose.msra.mxu0 %v1202
    %1280 = vmatprep.subr.mxu0 %v1197
    %1281 = vmatpush1.xpose.msra.mxu0 %v1196
    %1282 = vmatprep.subr.mxu0 0.0
    %1283 = vmatpush2.xpose.msra.mxu0 0.0
    %1284 = vmatprep.subr.mxu0 0.0
    %1285 = vmatpush2.xpose.msra.mxu0 0.0
    %1286 = vmatprep.subr.mxu0 0.0
    %1287 = vmatpush2.xpose.msra.mxu0 0.0
    %1288 = vmatprep.subr.mxu0 0.0
    %1289 = vmatpush2.xpose.msra.mxu0 0.0
    %1290 = vmatprep.subr.mxu0 0.0
    %1291 = vmatpush2.xpose.msra.mxu0 0.0
    %1292 = vmatprep.subr.mxu0 0.0
    %1293 = vmatpush2.xpose.msra.mxu0 0.0
    %1294 = vmatprep.subr.mxu0 0.0
    %1295 = vmatpush2.xpose.msra.mxu0 0.0
    %1296 = vmatprep.subr.mxu0 0.0
    %1297 = vmatpush2.xpose.msra.mxu0 0.0
    %1298 = vmatprep.subr.mxu0 0.0
    %1299 = vmatpush2.xpose.msra.mxu0 0.0
    %1300 = vmatprep.subr.mxu0 0.0
    %1301 = vmatpush2.xpose.msra.mxu0 0.0
    %1302 = vmatprep.subr.mxu0 0.0
    %1303 = vmatpush2.xpose.msra.mxu0 0.0
    %1304 = vmatprep.subr.mxu0 0.0
    %1305 = vmatpush2.xpose.msra.mxu0 0.0
    %1306 = vmatprep.subr.mxu0 0.0
    %1307 = vmatpush2.xpose.msra.mxu0 0.0
    %1308 = vmatprep.subr.mxu0 0.0
    %1309 = vmatpush2.xpose.msra.mxu0 0.0
    %1310 = vmatprep.subr.mxu0 0.0
    %1311 = vmatpush2.xpose.msra.mxu0 0.0
    %1312 = vmatprep.subr.mxu0 0.0
    %1313 = vmatpush2.xpose.msra.mxu0 0.0
    %1314 = vmatprep.mubr.f32.mxu0 %v1176
    %1315 = vmatmul.mubr.f32.gmra.mxu0 %v1175
    %v1316 = vpop.f32.mrf.mxu0
    %v1317 = vadd.f32 0.0, %v1316
    %v1318 = vpop.f32.mrf.mxu0
    %1319 = vdwg.mxu0
    %1320 = vmatprep.subr.mxu0 0.0
    %1321 = vmatpush1.xpose.msra.mxu0 0.0
    %1322 = vmatprep.subr.mxu0 0.0
    %1323 = vmatpush1.xpose.msra.mxu0 0.0
    %1324 = vmatprep.subr.mxu0 0.0
    %1325 = vmatpush1.xpose.msra.mxu0 0.0
    %1326 = vmatprep.subr.mxu0 0.0
    %1327 = vmatpush1.xpose.msra.mxu0 0.0
    %1328 = vmatprep.subr.mxu0 0.0
    %1329 = vmatpush1.xpose.msra.mxu0 0.0
    %1330 = vmatprep.subr.mxu0 0.0
    %1331 = vmatpush1.xpose.msra.mxu0 0.0
    %1332 = vmatprep.subr.mxu0 0.0
    %1333 = vmatpush1.xpose.msra.mxu0 0.0
    %1334 = vmatprep.subr.mxu0 %v1247
    %1335 = vmatpush1.xpose.msra.mxu0 %v1246
    %1336 = vmatprep.subr.mxu0 %v1241
    %1337 = vmatpush1.xpose.msra.mxu0 %v1240
    %1338 = vmatprep.subr.mxu0 %v1235
    %1339 = vmatpush1.xpose.msra.mxu0 %v1234
    %1340 = vmatprep.subr.mxu0 %v1229
    %1341 = vmatpush1.xpose.msra.mxu0 %v1228
    %1342 = vmatprep.subr.mxu0 %v1223
    %1343 = vmatpush1.xpose.msra.mxu0 %v1222
    %1344 = vmatprep.subr.mxu0 %v1217
    %1345 = vmatpush1.xpose.msra.mxu0 %v1216
    %1346 = vmatprep.subr.mxu0 %v1211
    %1347 = vmatpush1.xpose.msra.mxu0 %v1210
    %1348 = vmatprep.subr.mxu0 %v1205
    %1349 = vmatpush1.xpose.msra.mxu0 %v1204
    %1350 = vmatprep.subr.mxu0 %v1199
    %1351 = vmatpush1.xpose.msra.mxu0 %v1198
    %1352 = vmatprep.subr.mxu0 0.0
    %1353 = vmatpush2.xpose.msra.mxu0 0.0
    %1354 = vmatprep.subr.mxu0 0.0
    %1355 = vmatpush2.xpose.msra.mxu0 0.0
    %1356 = vmatprep.subr.mxu0 0.0
    %1357 = vmatpush2.xpose.msra.mxu0 0.0
    %1358 = vmatprep.subr.mxu0 0.0
    %1359 = vmatpush2.xpose.msra.mxu0 0.0
    %1360 = vmatprep.subr.mxu0 0.0
    %1361 = vmatpush2.xpose.msra.mxu0 0.0
    %1362 = vmatprep.subr.mxu0 0.0
    %1363 = vmatpush2.xpose.msra.mxu0 0.0
    %1364 = vmatprep.subr.mxu0 0.0
    %1365 = vmatpush2.xpose.msra.mxu0 0.0
    %1366 = vmatprep.subr.mxu0 0.0
    %1367 = vmatpush2.xpose.msra.mxu0 0.0
    %1368 = vmatprep.subr.mxu0 0.0
    %1369 = vmatpush2.xpose.msra.mxu0 0.0
    %1370 = vmatprep.subr.mxu0 0.0
    %1371 = vmatpush2.xpose.msra.mxu0 0.0
    %1372 = vmatprep.subr.mxu0 0.0
    %1373 = vmatpush2.xpose.msra.mxu0 0.0
    %1374 = vmatprep.subr.mxu0 0.0
    %1375 = vmatpush2.xpose.msra.mxu0 0.0
    %1376 = vmatprep.subr.mxu0 0.0
    %1377 = vmatpush2.xpose.msra.mxu0 0.0
    %1378 = vmatprep.subr.mxu0 0.0
    %1379 = vmatpush2.xpose.msra.mxu0 0.0
    %1380 = vmatprep.subr.mxu0 0.0
    %1381 = vmatpush2.xpose.msra.mxu0 0.0
    %1382 = vmatprep.subr.mxu0 0.0
    %1383 = vmatpush2.xpose.msra.mxu0 0.0
    %1384 = vmatprep.mubr.f32.mxu0 %v1178
    %1385 = vmatmul.mubr.f32.gmra.mxu0 %v1177
    %v1386 = vpop.f32.mrf.mxu0
    %v1387 = vadd.f32 %v1317, %v1386
    %v1388 = vpop.f32.mrf.mxu0
    %1389 = vdwg.mxu0
    %1390 = vmatprep.subr.mxu0 0.0
    %1391 = vmatpush1.xpose.msra.mxu0 0.0
    %1392 = vmatprep.subr.mxu0 0.0
    %1393 = vmatpush1.xpose.msra.mxu0 0.0
    %1394 = vmatprep.subr.mxu0 0.0
    %1395 = vmatpush1.xpose.msra.mxu0 0.0
    %1396 = vmatprep.subr.mxu0 0.0
    %1397 = vmatpush1.xpose.msra.mxu0 0.0
    %1398 = vmatprep.subr.mxu0 0.0
    %1399 = vmatpush1.xpose.msra.mxu0 0.0
    %1400 = vmatprep.subr.mxu0 0.0
    %1401 = vmatpush1.xpose.msra.mxu0 0.0
    %1402 = vmatprep.subr.mxu0 0.0
    %1403 = vmatpush1.xpose.msra.mxu0 0.0
    %1404 = vmatprep.subr.mxu0 %v1249
    %1405 = vmatpush1.xpose.msra.mxu0 %v1248
    %1406 = vmatprep.subr.mxu0 %v1243
    %1407 = vmatpush1.xpose.msra.mxu0 %v1242
    %1408 = vmatprep.subr.mxu0 %v1237
    %1409 = vmatpush1.xpose.msra.mxu0 %v1236
    %1410 = vmatprep.subr.mxu0 %v1231
    %1411 = vmatpush1.xpose.msra.mxu0 %v1230
    %1412 = vmatprep.subr.mxu0 %v1225
    %1413 = vmatpush1.xpose.msra.mxu0 %v1224
    %1414 = vmatprep.subr.mxu0 %v1219
    %1415 = vmatpush1.xpose.msra.mxu0 %v1218
    %1416 = vmatprep.subr.mxu0 %v1213
    %1417 = vmatpush1.xpose.msra.mxu0 %v1212
    %1418 = vmatprep.subr.mxu0 %v1207
    %1419 = vmatpush1.xpose.msra.mxu0 %v1206
    %1420 = vmatprep.subr.mxu0 %v1201
    %1421 = vmatpush1.xpose.msra.mxu0 %v1200
    %1422 = vmatprep.subr.mxu0 0.0
    %1423 = vmatpush2.xpose.msra.mxu0 0.0
    %1424 = vmatprep.subr.mxu0 0.0
    %1425 = vmatpush2.xpose.msra.mxu0 0.0
    %1426 = vmatprep.subr.mxu0 0.0
    %1427 = vmatpush2.xpose.msra.mxu0 0.0
    %1428 = vmatprep.subr.mxu0 0.0
    %1429 = vmatpush2.xpose.msra.mxu0 0.0
    %1430 = vmatprep.subr.mxu0 0.0
    %1431 = vmatpush2.xpose.msra.mxu0 0.0
    %1432 = vmatprep.subr.mxu0 0.0
    %1433 = vmatpush2.xpose.msra.mxu0 0.0
    %1434 = vmatprep.subr.mxu0 0.0
    %1435 = vmatpush2.xpose.msra.mxu0 0.0
    %1436 = vmatprep.subr.mxu0 0.0
    %1437 = vmatpush2.xpose.msra.mxu0 0.0
    %1438 = vmatprep.subr.mxu0 0.0
    %1439 = vmatpush2.xpose.msra.mxu0 0.0
    %1440 = vmatprep.subr.mxu0 0.0
    %1441 = vmatpush2.xpose.msra.mxu0 0.0
    %1442 = vmatprep.subr.mxu0 0.0
    %1443 = vmatpush2.xpose.msra.mxu0 0.0
    %1444 = vmatprep.subr.mxu0 0.0
    %1445 = vmatpush2.xpose.msra.mxu0 0.0
    %1446 = vmatprep.subr.mxu0 0.0
    %1447 = vmatpush2.xpose.msra.mxu0 0.0
    %1448 = vmatprep.subr.mxu0 0.0
    %1449 = vmatpush2.xpose.msra.mxu0 0.0
    %1450 = vmatprep.subr.mxu0 0.0
    %1451 = vmatpush2.xpose.msra.mxu0 0.0
    %1452 = vmatprep.subr.mxu0 0.0
    %1453 = vmatpush2.xpose.msra.mxu0 0.0
    %1454 = vmatprep.mubr.f32.mxu0 %v1180
    %1455 = vmatmul.mubr.f32.gmra.mxu0 %v1179
    %v1456 = vpop.f32.mrf.mxu0
    %v1457 = vadd.f32 %v1387, %v1456
    %v1458 = vpop.f32.mrf.mxu0
    %1459 = vdwg.mxu0
    %vm1460 = vcmask 584704
    %1461 = vst.msk [vmem:[#allocation8] sm:$0xf] %vm1460, %v1457
    %v1462 = vld [vmem:[%s7] sm:$0xff]
    %v1463 = vld [vmem:[%s7 + $0x8] sm:$0xff]
    %v1464 = vld [vmem:[%s7 + $0x10] sm:$0xff]
    %v1465 = vld [vmem:[%s7 + $0x18] sm:$0xff]
    %v1466 = vld [vmem:[%s7 + $0x20] sm:$0xff]
    %v1467 = vld [vmem:[%s7 + $0x28] sm:$0xff]
    %v1468 = vld [vmem:[%s7 + $0x30] sm:$0xff]
    %v1469 = vld [vmem:[%s7 + $0x38] sm:$0xff]
    %v1470 = vld [vmem:[%s7 + $0x40] sm:$0xff]
    %vm1471 = vcmask 31744
    %v1473 = vsel %vm1471, %v1462, 0
    %v1476 = vsel %vm1471, %v1463, 0
    %v1479 = vsel %vm1471, %v1464, 0
    %v1482 = vsel %vm1471, %v1465, 0
    %v1485 = vsel %vm1471, %v1466, 0
    %v1488 = vsel %vm1471, %v1467, 0
    %v1491 = vsel %vm1471, %v1468, 0
    %v1494 = vsel %vm1471, %v1469, 0
    %v1497 = vsel %vm1471, %v1470, 0
    %v1500 = vsel %vm371, %v1175, 0
    %v1503 = vsel %vm371, %v1176, 0
    %v1506 = vsel %vm371, %v1177, 0
    %v1509 = vsel %vm371, %v1178, 0
    %v1512 = vsel %vm371, %v1179, 0
    %v1515 = vsel %vm371, %v1180, 0
    %1517 = vmatprep.subr.mxu0 0.0
    %1518 = vmatpush1.msra.mxu0 0.0
    %1519 = vmatprep.subr.mxu0 0.0
    %1520 = vmatpush1.msra.mxu0 0.0
    %1521 = vmatprep.subr.mxu0 0.0
    %1522 = vmatpush1.msra.mxu0 0.0
    %1523 = vmatprep.subr.mxu0 0.0
    %1524 = vmatpush1.msra.mxu0 0.0
    %1525 = vmatprep.subr.mxu0 0.0
    %1526 = vmatpush1.msra.mxu0 0.0
    %1527 = vmatprep.subr.mxu0 0.0
    %1528 = vmatpush1.msra.mxu0 0.0
    %1529 = vmatprep.subr.mxu0 0.0
    %1530 = vmatpush1.msra.mxu0 0.0
    %1531 = vmatprep.subr.mxu0 0.0
    %1532 = vmatpush1.msra.mxu0 0.0
    %1533 = vmatprep.subr.mxu0 0.0
    %1534 = vmatpush1.msra.mxu0 0.0
    %1535 = vmatprep.subr.mxu0 0.0
    %1536 = vmatpush1.msra.mxu0 0.0
    %1537 = vmatprep.subr.mxu0 0.0
    %1538 = vmatpush1.msra.mxu0 0.0
    %1539 = vmatprep.subr.mxu0 0.0
    %1540 = vmatpush1.msra.mxu0 0.0
    %1541 = vmatprep.subr.mxu0 0.0
    %1542 = vmatpush1.msra.mxu0 0.0
    %1543 = vmatprep.subr.mxu0 0.0
    %1544 = vmatpush1.msra.mxu0 0.0
    %1545 = vmatprep.subr.mxu0 0.0
    %1546 = vmatpush1.msra.mxu0 0.0
    %1547 = vmatprep.subr.mxu0 %v1503
    %1548 = vmatpush1.msra.mxu0 %v1500
    %1549 = vmatprep.subr.mxu0 0.0
    %1550 = vmatpush2.msra.mxu0 0.0
    %1551 = vmatprep.subr.mxu0 0.0
    %1552 = vmatpush2.msra.mxu0 0.0
    %1553 = vmatprep.subr.mxu0 0.0
    %1554 = vmatpush2.msra.mxu0 0.0
    %1555 = vmatprep.subr.mxu0 0.0
    %1556 = vmatpush2.msra.mxu0 0.0
    %1557 = vmatprep.subr.mxu0 0.0
    %1558 = vmatpush2.msra.mxu0 0.0
    %1559 = vmatprep.subr.mxu0 0.0
    %1560 = vmatpush2.msra.mxu0 0.0
    %1561 = vmatprep.subr.mxu0 0.0
    %1562 = vmatpush2.msra.mxu0 0.0
    %1563 = vmatprep.subr.mxu0 0.0
    %1564 = vmatpush2.msra.mxu0 0.0
    %1565 = vmatprep.subr.mxu0 0.0
    %1566 = vmatpush2.msra.mxu0 0.0
    %1567 = vmatprep.subr.mxu0 0.0
    %1568 = vmatpush2.msra.mxu0 0.0
    %1569 = vmatprep.subr.mxu0 0.0
    %1570 = vmatpush2.msra.mxu0 0.0
    %1571 = vmatprep.subr.mxu0 0.0
    %1572 = vmatpush2.msra.mxu0 0.0
    %1573 = vmatprep.subr.mxu0 0.0
    %1574 = vmatpush2.msra.mxu0 0.0
    %1575 = vmatprep.subr.mxu0 0.0
    %1576 = vmatpush2.msra.mxu0 0.0
    %1577 = vmatprep.subr.mxu0 0.0
    %1578 = vmatpush2.msra.mxu0 0.0
    %1579 = vmatprep.subr.mxu0 0.0
    %1580 = vmatpush2.msra.mxu0 0.0
    %1581 = vmatprep.mubr.f32.mxu0 0.0
    %1582 = vmatmul.mubr.f32.gmra.mxu0 %v1473
    %v1583 = vpop.f32.mrf.mxu0
    %v1584 = vadd.f32 0.0, %v1583
    %v1585 = vpop.f32.mrf.mxu0
    %v1586 = vadd.f32 0.0, %v1585
    %1587 = vmatprep.mubr.f32.mxu0 0.0
    %1588 = vmatmul.mubr.f32.gmra.mxu0 %v1476
    %v1589 = vpop.f32.mrf.mxu0
    %v1590 = vadd.f32 0.0, %v1589
    %v1591 = vpop.f32.mrf.mxu0
    %v1592 = vadd.f32 0.0, %v1591
    %1593 = vmatprep.mubr.f32.mxu0 0.0
    %1594 = vmatmul.mubr.f32.gmra.mxu0 %v1479
    %v1595 = vpop.f32.mrf.mxu0
    %v1596 = vadd.f32 0.0, %v1595
    %v1597 = vpop.f32.mrf.mxu0
    %v1598 = vadd.f32 0.0, %v1597
    %1599 = vmatprep.mubr.f32.mxu0 0.0
    %1600 = vmatmul.mubr.f32.gmra.mxu0 %v1482
    %v1601 = vpop.f32.mrf.mxu0
    %v1602 = vadd.f32 0.0, %v1601
    %v1603 = vpop.f32.mrf.mxu0
    %v1604 = vadd.f32 0.0, %v1603
    %1605 = vmatprep.mubr.f32.mxu0 0.0
    %1606 = vmatmul.mubr.f32.gmra.mxu0 %v1485
    %v1607 = vpop.f32.mrf.mxu0
    %v1608 = vadd.f32 0.0, %v1607
    %v1609 = vpop.f32.mrf.mxu0
    %v1610 = vadd.f32 0.0, %v1609
    %1611 = vmatprep.mubr.f32.mxu0 0.0
    %1612 = vmatmul.mubr.f32.gmra.mxu0 %v1488
    %v1613 = vpop.f32.mrf.mxu0
    %v1614 = vadd.f32 0.0, %v1613
    %v1615 = vpop.f32.mrf.mxu0
    %v1616 = vadd.f32 0.0, %v1615
    %1617 = vmatprep.mubr.f32.mxu0 0.0
    %1618 = vmatmul.mubr.f32.gmra.mxu0 %v1491
    %v1619 = vpop.f32.mrf.mxu0
    %v1620 = vadd.f32 0.0, %v1619
    %v1621 = vpop.f32.mrf.mxu0
    %v1622 = vadd.f32 0.0, %v1621
    %1623 = vmatprep.mubr.f32.mxu0 0.0
    %1624 = vmatmul.mubr.f32.gmra.mxu0 %v1494
    %v1625 = vpop.f32.mrf.mxu0
    %v1626 = vadd.f32 0.0, %v1625
    %v1627 = vpop.f32.mrf.mxu0
    %v1628 = vadd.f32 0.0, %v1627
    %1629 = vmatprep.mubr.f32.mxu0 0.0
    %1630 = vmatmul.mubr.f32.gmra.mxu0 %v1497
    %v1631 = vpop.f32.mrf.mxu0
    %v1632 = vadd.f32 0.0, %v1631
    %v1633 = vpop.f32.mrf.mxu0
    %v1634 = vadd.f32 0.0, %v1633
    %1635 = vdwg.mxu0
    %1636 = vmatprep.subr.mxu0 0.0
    %1637 = vmatpush1.msra.mxu0 0.0
    %1638 = vmatprep.subr.mxu0 0.0
    %1639 = vmatpush1.msra.mxu0 0.0
    %1640 = vmatprep.subr.mxu0 0.0
    %1641 = vmatpush1.msra.mxu0 0.0
    %1642 = vmatprep.subr.mxu0 0.0
    %1643 = vmatpush1.msra.mxu0 0.0
    %1644 = vmatprep.subr.mxu0 0.0
    %1645 = vmatpush1.msra.mxu0 0.0
    %1646 = vmatprep.subr.mxu0 0.0
    %1647 = vmatpush1.msra.mxu0 0.0
    %1648 = vmatprep.subr.mxu0 0.0
    %1649 = vmatpush1.msra.mxu0 0.0
    %1650 = vmatprep.subr.mxu0 0.0
    %1651 = vmatpush1.msra.mxu0 0.0
    %1652 = vmatprep.subr.mxu0 0.0
    %1653 = vmatpush1.msra.mxu0 0.0
    %1654 = vmatprep.subr.mxu0 0.0
    %1655 = vmatpush1.msra.mxu0 0.0
    %1656 = vmatprep.subr.mxu0 0.0
    %1657 = vmatpush1.msra.mxu0 0.0
    %1658 = vmatprep.subr.mxu0 0.0
    %1659 = vmatpush1.msra.mxu0 0.0
    %1660 = vmatprep.subr.mxu0 0.0
    %1661 = vmatpush1.msra.mxu0 0.0
    %1662 = vmatprep.subr.mxu0 0.0
    %1663 = vmatpush1.msra.mxu0 0.0
    %1664 = vmatprep.subr.mxu0 0.0
    %1665 = vmatpush1.msra.mxu0 0.0
    %1666 = vmatprep.subr.mxu0 %v1509
    %1667 = vmatpush1.msra.mxu0 %v1506
    %1668 = vmatprep.subr.mxu0 0.0
    %1669 = vmatpush2.msra.mxu0 0.0
    %1670 = vmatprep.subr.mxu0 0.0
    %1671 = vmatpush2.msra.mxu0 0.0
    %1672 = vmatprep.subr.mxu0 0.0
    %1673 = vmatpush2.msra.mxu0 0.0
    %1674 = vmatprep.subr.mxu0 0.0
    %1675 = vmatpush2.msra.mxu0 0.0
    %1676 = vmatprep.subr.mxu0 0.0
    %1677 = vmatpush2.msra.mxu0 0.0
    %1678 = vmatprep.subr.mxu0 0.0
    %1679 = vmatpush2.msra.mxu0 0.0
    %1680 = vmatprep.subr.mxu0 0.0
    %1681 = vmatpush2.msra.mxu0 0.0
    %1682 = vmatprep.subr.mxu0 0.0
    %1683 = vmatpush2.msra.mxu0 0.0
    %1684 = vmatprep.subr.mxu0 0.0
    %1685 = vmatpush2.msra.mxu0 0.0
    %1686 = vmatprep.subr.mxu0 0.0
    %1687 = vmatpush2.msra.mxu0 0.0
    %1688 = vmatprep.subr.mxu0 0.0
    %1689 = vmatpush2.msra.mxu0 0.0
    %1690 = vmatprep.subr.mxu0 0.0
    %1691 = vmatpush2.msra.mxu0 0.0
    %1692 = vmatprep.subr.mxu0 0.0
    %1693 = vmatpush2.msra.mxu0 0.0
    %1694 = vmatprep.subr.mxu0 0.0
    %1695 = vmatpush2.msra.mxu0 0.0
    %1696 = vmatprep.subr.mxu0 0.0
    %1697 = vmatpush2.msra.mxu0 0.0
    %1698 = vmatprep.subr.mxu0 0.0
    %1699 = vmatpush2.msra.mxu0 0.0
    %1700 = vmatprep.mubr.f32.mxu0 0.0
    %1701 = vmatmul.mubr.f32.gmra.mxu0 %v1473
    %v1702 = vpop.f32.mrf.mxu0
    %v1703 = vadd.f32 0.0, %v1702
    %v1704 = vpop.f32.mrf.mxu0
    %v1705 = vadd.f32 0.0, %v1704
    %1706 = vmatprep.mubr.f32.mxu0 0.0
    %1707 = vmatmul.mubr.f32.gmra.mxu0 %v1476
    %v1708 = vpop.f32.mrf.mxu0
    %v1709 = vadd.f32 0.0, %v1708
    %v1710 = vpop.f32.mrf.mxu0
    %v1711 = vadd.f32 0.0, %v1710
    %1712 = vmatprep.mubr.f32.mxu0 0.0
    %1713 = vmatmul.mubr.f32.gmra.mxu0 %v1479
    %v1714 = vpop.f32.mrf.mxu0
    %v1715 = vadd.f32 0.0, %v1714
    %v1716 = vpop.f32.mrf.mxu0
    %v1717 = vadd.f32 0.0, %v1716
    %1718 = vmatprep.mubr.f32.mxu0 0.0
    %1719 = vmatmul.mubr.f32.gmra.mxu0 %v1482
    %v1720 = vpop.f32.mrf.mxu0
    %v1721 = vadd.f32 0.0, %v1720
    %v1722 = vpop.f32.mrf.mxu0
    %v1723 = vadd.f32 0.0, %v1722
    %1724 = vmatprep.mubr.f32.mxu0 0.0
    %1725 = vmatmul.mubr.f32.gmra.mxu0 %v1485
    %v1726 = vpop.f32.mrf.mxu0
    %v1727 = vadd.f32 0.0, %v1726
    %v1728 = vpop.f32.mrf.mxu0
    %v1729 = vadd.f32 0.0, %v1728
    %1730 = vmatprep.mubr.f32.mxu0 0.0
    %1731 = vmatmul.mubr.f32.gmra.mxu0 %v1488
    %v1732 = vpop.f32.mrf.mxu0
    %v1733 = vadd.f32 0.0, %v1732
    %v1734 = vpop.f32.mrf.mxu0
    %v1735 = vadd.f32 0.0, %v1734
    %1736 = vmatprep.mubr.f32.mxu0 0.0
    %1737 = vmatmul.mubr.f32.gmra.mxu0 %v1491
    %v1738 = vpop.f32.mrf.mxu0
    %v1739 = vadd.f32 0.0, %v1738
    %v1740 = vpop.f32.mrf.mxu0
    %v1741 = vadd.f32 0.0, %v1740
    %1742 = vmatprep.mubr.f32.mxu0 0.0
    %1743 = vmatmul.mubr.f32.gmra.mxu0 %v1494
    %v1744 = vpop.f32.mrf.mxu0
    %v1745 = vadd.f32 0.0, %v1744
    %v1746 = vpop.f32.mrf.mxu0
    %v1747 = vadd.f32 0.0, %v1746
    %1748 = vmatprep.mubr.f32.mxu0 0.0
    %1749 = vmatmul.mubr.f32.gmra.mxu0 %v1497
    %v1750 = vpop.f32.mrf.mxu0
    %v1751 = vadd.f32 0.0, %v1750
    %v1752 = vpop.f32.mrf.mxu0
    %v1753 = vadd.f32 0.0, %v1752
    %1754 = vdwg.mxu0
    %1755 = vmatprep.subr.mxu0 0.0
    %1756 = vmatpush1.msra.mxu0 0.0
    %1757 = vmatprep.subr.mxu0 0.0
    %1758 = vmatpush1.msra.mxu0 0.0
    %1759 = vmatprep.subr.mxu0 0.0
    %1760 = vmatpush1.msra.mxu0 0.0
    %1761 = vmatprep.subr.mxu0 0.0
    %1762 = vmatpush1.msra.mxu0 0.0
    %1763 = vmatprep.subr.mxu0 0.0
    %1764 = vmatpush1.msra.mxu0 0.0
    %1765 = vmatprep.subr.mxu0 0.0
    %1766 = vmatpush1.msra.mxu0 0.0
    %1767 = vmatprep.subr.mxu0 0.0
    %1768 = vmatpush1.msra.mxu0 0.0
    %1769 = vmatprep.subr.mxu0 0.0
    %1770 = vmatpush1.msra.mxu0 0.0
    %1771 = vmatprep.subr.mxu0 0.0
    %1772 = vmatpush1.msra.mxu0 0.0
    %1773 = vmatprep.subr.mxu0 0.0
    %1774 = vmatpush1.msra.mxu0 0.0
    %1775 = vmatprep.subr.mxu0 0.0
    %1776 = vmatpush1.msra.mxu0 0.0
    %1777 = vmatprep.subr.mxu0 0.0
    %1778 = vmatpush1.msra.mxu0 0.0
    %1779 = vmatprep.subr.mxu0 0.0
    %1780 = vmatpush1.msra.mxu0 0.0
    %1781 = vmatprep.subr.mxu0 0.0
    %1782 = vmatpush1.msra.mxu0 0.0
    %1783 = vmatprep.subr.mxu0 0.0
    %1784 = vmatpush1.msra.mxu0 0.0
    %1785 = vmatprep.subr.mxu0 %v1515
    %1786 = vmatpush1.msra.mxu0 %v1512
    %1787 = vmatprep.subr.mxu0 0.0
    %1788 = vmatpush2.msra.mxu0 0.0
    %1789 = vmatprep.subr.mxu0 0.0
    %1790 = vmatpush2.msra.mxu0 0.0
    %1791 = vmatprep.subr.mxu0 0.0
    %1792 = vmatpush2.msra.mxu0 0.0
    %1793 = vmatprep.subr.mxu0 0.0
    %1794 = vmatpush2.msra.mxu0 0.0
    %1795 = vmatprep.subr.mxu0 0.0
    %1796 = vmatpush2.msra.mxu0 0.0
    %1797 = vmatprep.subr.mxu0 0.0
    %1798 = vmatpush2.msra.mxu0 0.0
    %1799 = vmatprep.subr.mxu0 0.0
    %1800 = vmatpush2.msra.mxu0 0.0
    %1801 = vmatprep.subr.mxu0 0.0
    %1802 = vmatpush2.msra.mxu0 0.0
    %1803 = vmatprep.subr.mxu0 0.0
    %1804 = vmatpush2.msra.mxu0 0.0
    %1805 = vmatprep.subr.mxu0 0.0
    %1806 = vmatpush2.msra.mxu0 0.0
    %1807 = vmatprep.subr.mxu0 0.0
    %1808 = vmatpush2.msra.mxu0 0.0
    %1809 = vmatprep.subr.mxu0 0.0
    %1810 = vmatpush2.msra.mxu0 0.0
    %1811 = vmatprep.subr.mxu0 0.0
    %1812 = vmatpush2.msra.mxu0 0.0
    %1813 = vmatprep.subr.mxu0 0.0
    %1814 = vmatpush2.msra.mxu0 0.0
    %1815 = vmatprep.subr.mxu0 0.0
    %1816 = vmatpush2.msra.mxu0 0.0
    %1817 = vmatprep.subr.mxu0 0.0
    %1818 = vmatpush2.msra.mxu0 0.0
    %1819 = vmatprep.mubr.f32.mxu0 0.0
    %1820 = vmatmul.mubr.f32.gmra.mxu0 %v1473
    %v1821 = vpop.f32.mrf.mxu0
    %v1822 = vadd.f32 0.0, %v1821
    %v1823 = vpop.f32.mrf.mxu0
    %v1824 = vadd.f32 0.0, %v1823
    %1825 = vmatprep.mubr.f32.mxu0 0.0
    %1826 = vmatmul.mubr.f32.gmra.mxu0 %v1476
    %v1827 = vpop.f32.mrf.mxu0
    %v1828 = vadd.f32 0.0, %v1827
    %v1829 = vpop.f32.mrf.mxu0
    %v1830 = vadd.f32 0.0, %v1829
    %1831 = vmatprep.mubr.f32.mxu0 0.0
    %1832 = vmatmul.mubr.f32.gmra.mxu0 %v1479
    %v1833 = vpop.f32.mrf.mxu0
    %v1834 = vadd.f32 0.0, %v1833
    %v1835 = vpop.f32.mrf.mxu0
    %v1836 = vadd.f32 0.0, %v1835
    %1837 = vmatprep.mubr.f32.mxu0 0.0
    %1838 = vmatmul.mubr.f32.gmra.mxu0 %v1482
    %v1839 = vpop.f32.mrf.mxu0
    %v1840 = vadd.f32 0.0, %v1839
    %v1841 = vpop.f32.mrf.mxu0
    %v1842 = vadd.f32 0.0, %v1841
    %1843 = vmatprep.mubr.f32.mxu0 0.0
    %1844 = vmatmul.mubr.f32.gmra.mxu0 %v1485
    %v1845 = vpop.f32.mrf.mxu0
    %v1846 = vadd.f32 0.0, %v1845
    %v1847 = vpop.f32.mrf.mxu0
    %v1848 = vadd.f32 0.0, %v1847
    %1849 = vmatprep.mubr.f32.mxu0 0.0
    %1850 = vmatmul.mubr.f32.gmra.mxu0 %v1488
    %v1851 = vpop.f32.mrf.mxu0
    %v1852 = vadd.f32 0.0, %v1851
    %v1853 = vpop.f32.mrf.mxu0
    %v1854 = vadd.f32 0.0, %v1853
    %1855 = vmatprep.mubr.f32.mxu0 0.0
    %1856 = vmatmul.mubr.f32.gmra.mxu0 %v1491
    %v1857 = vpop.f32.mrf.mxu0
    %v1858 = vadd.f32 0.0, %v1857
    %v1859 = vpop.f32.mrf.mxu0
    %v1860 = vadd.f32 0.0, %v1859
    %1861 = vmatprep.mubr.f32.mxu0 0.0
    %1862 = vmatmul.mubr.f32.gmra.mxu0 %v1494
    %v1863 = vpop.f32.mrf.mxu0
    %v1864 = vadd.f32 0.0, %v1863
    %v1865 = vpop.f32.mrf.mxu0
    %v1866 = vadd.f32 0.0, %v1865
    %1867 = vmatprep.mubr.f32.mxu0 0.0
    %1868 = vmatmul.mubr.f32.gmra.mxu0 %v1497
    %v1869 = vpop.f32.mrf.mxu0
    %v1870 = vadd.f32 0.0, %v1869
    %v1871 = vpop.f32.mrf.mxu0
    %v1872 = vadd.f32 0.0, %v1871
    %1873 = vdwg.mxu0
    %1874 = vrot.lane.b32.xlu0 %v1584, 109
    %v1875 = vpop.permute.xlu0 %1874
    %1876 = vrot.lane.b32.xlu0 %v1586, 109
    %v1877 = vpop.permute.xlu0 %1876
    %1878 = vrot.lane.b32.xlu0 %v1703, 109
    %v1879 = vpop.permute.xlu0 %1878
    %1880 = vrot.lane.b32.xlu0 %v1705, 109
    %v1881 = vpop.permute.xlu0 %1880
    %1882 = vrot.lane.b32.xlu0 %v1822, 109
    %v1883 = vpop.permute.xlu0 %1882
    %1884 = vrot.lane.b32.xlu0 %v1824, 109
    %v1885 = vpop.permute.xlu0 %1884
    %v1886 = vsel %vm317, %v1883, %v1885
    %v1887 = vsel %vm317, %v1881, %v1883
    %v1888 = vsel %vm317, %v1879, %v1881
    %v1889 = vsel %vm317, %v1877, %v1879
    %v1890 = vsel %vm317, %v1875, %v1877
    %v1891 = vsel %vm317, %v1885, %v1875
    %v1892 = vadd.f32 %v1890, 0.0
    %v1893 = vadd.f32 %v1889, 0.0
    %v1894 = vadd.f32 %v1888, 0.0
    %v1895 = vadd.f32 %v1887, 0.0
    %v1896 = vadd.f32 %v1886, 0.0
    %v1897 = vadd.f32 %v1891, 0.0
    %1898 = vrot.lane.b32.xlu0 %v1590, 110
    %v1899 = vpop.permute.xlu0 %1898
    %1900 = vrot.lane.b32.xlu0 %v1592, 110
    %v1901 = vpop.permute.xlu0 %1900
    %1902 = vrot.lane.b32.xlu0 %v1709, 110
    %v1903 = vpop.permute.xlu0 %1902
    %1904 = vrot.lane.b32.xlu0 %v1711, 110
    %v1905 = vpop.permute.xlu0 %1904
    %1906 = vrot.lane.b32.xlu0 %v1828, 110
    %v1907 = vpop.permute.xlu0 %1906
    %1908 = vrot.lane.b32.xlu0 %v1830, 110
    %v1909 = vpop.permute.xlu0 %1908
    %v1910 = vsel %vm274, %v1907, %v1909
    %v1911 = vsel %vm274, %v1905, %v1907
    %v1912 = vsel %vm274, %v1903, %v1905
    %v1913 = vsel %vm274, %v1901, %v1903
    %v1914 = vsel %vm274, %v1899, %v1901
    %v1915 = vsel %vm274, %v1909, %v1899
    %v1916 = vadd.f32 %v1892, %v1914
    %v1917 = vadd.f32 %v1893, %v1913
    %v1918 = vadd.f32 %v1894, %v1912
    %v1919 = vadd.f32 %v1895, %v1911
    %v1920 = vadd.f32 %v1896, %v1910
    %v1921 = vadd.f32 %v1897, %v1915
    %1922 = vrot.lane.b32.xlu0 %v1596, 111
    %v1923 = vpop.permute.xlu0 %1922
    %1924 = vrot.lane.b32.xlu0 %v1598, 111
    %v1925 = vpop.permute.xlu0 %1924
    %1926 = vrot.lane.b32.xlu0 %v1715, 111
    %v1927 = vpop.permute.xlu0 %1926
    %1928 = vrot.lane.b32.xlu0 %v1717, 111
    %v1929 = vpop.permute.xlu0 %1928
    %1930 = vrot.lane.b32.xlu0 %v1834, 111
    %v1931 = vpop.permute.xlu0 %1930
    %1932 = vrot.lane.b32.xlu0 %v1836, 111
    %v1933 = vpop.permute.xlu0 %1932
    %v1934 = vsel %vm249, %v1931, %v1933
    %v1935 = vsel %vm249, %v1929, %v1931
    %v1936 = vsel %vm249, %v1927, %v1929
    %v1937 = vsel %vm249, %v1925, %v1927
    %v1938 = vsel %vm249, %v1923, %v1925
    %v1939 = vsel %vm249, %v1933, %v1923
    %v1940 = vadd.f32 %v1916, %v1938
    %v1941 = vadd.f32 %v1917, %v1937
    %v1942 = vadd.f32 %v1918, %v1936
    %v1943 = vadd.f32 %v1919, %v1935
    %v1944 = vadd.f32 %v1920, %v1934
    %v1945 = vadd.f32 %v1921, %v1939
    %1946 = vrot.lane.b32.xlu0 %v1602, 127
    %v1947 = vpop.permute.xlu0 %1946
    %1948 = vrot.lane.b32.xlu0 %v1604, 127
    %v1949 = vpop.permute.xlu0 %1948
    %1950 = vrot.lane.b32.xlu0 %v1721, 127
    %v1951 = vpop.permute.xlu0 %1950
    %1952 = vrot.lane.b32.xlu0 %v1723, 127
    %v1953 = vpop.permute.xlu0 %1952
    %1954 = vrot.lane.b32.xlu0 %v1840, 127
    %v1955 = vpop.permute.xlu0 %1954
    %1956 = vrot.lane.b32.xlu0 %v1842, 127
    %v1957 = vpop.permute.xlu0 %1956
    %v1958 = vsel %vm206, %v1955, %v1957
    %v1959 = vsel %vm206, %v1953, %v1955
    %v1960 = vsel %vm206, %v1951, %v1953
    %v1961 = vsel %vm206, %v1949, %v1951
    %v1962 = vsel %vm206, %v1947, %v1949
    %v1963 = vsel %vm206, %v1957, %v1947
    %v1964 = vadd.f32 %v1940, %v1962
    %v1965 = vadd.f32 %v1941, %v1961
    %v1966 = vadd.f32 %v1942, %v1960
    %v1967 = vadd.f32 %v1943, %v1959
    %v1968 = vadd.f32 %v1944, %v1958
    %v1969 = vadd.f32 %v1945, %v1963
    %v1970 = vadd.f32 %v1964, %v1608
    %v1971 = vadd.f32 %v1965, %v1610
    %v1972 = vadd.f32 %v1966, %v1727
    %v1973 = vadd.f32 %v1967, %v1729
    %v1974 = vadd.f32 %v1968, %v1846
    %v1975 = vadd.f32 %v1969, %v1848
    %1976 = vrot.lane.b32.xlu0 %v1614, 1
    %v1977 = vpop.permute.xlu0 %1976
    %1978 = vrot.lane.b32.xlu0 %v1616, 1
    %v1979 = vpop.permute.xlu0 %1978
    %1980 = vrot.lane.b32.xlu0 %v1733, 1
    %v1981 = vpop.permute.xlu0 %1980
    %1982 = vrot.lane.b32.xlu0 %v1735, 1
    %v1983 = vpop.permute.xlu0 %1982
    %1984 = vrot.lane.b32.xlu0 %v1852, 1
    %v1985 = vpop.permute.xlu0 %1984
    %1986 = vrot.lane.b32.xlu0 %v1854, 1
    %v1987 = vpop.permute.xlu0 %1986
    %v1988 = vsel %vm157, %v1985, %v1987
    %v1989 = vsel %vm157, %v1983, %v1985
    %v1990 = vsel %vm157, %v1981, %v1983
    %v1991 = vsel %vm157, %v1979, %v1981
    %v1992 = vsel %vm157, %v1977, %v1979
    %v1993 = vsel %vm157, %v1987, %v1977
    %v1994 = vadd.f32 %v1970, %v1993
    %v1995 = vadd.f32 %v1971, %v1992
    %v1996 = vadd.f32 %v1972, %v1991
    %v1997 = vadd.f32 %v1973, %v1990
    %v1998 = vadd.f32 %v1974, %v1989
    %v1999 = vadd.f32 %v1975, %v1988
    %2000 = vrot.lane.b32.xlu0 %v1620, 17
    %v2001 = vpop.permute.xlu0 %2000
    %2002 = vrot.lane.b32.xlu0 %v1622, 17
    %v2003 = vpop.permute.xlu0 %2002
    %2004 = vrot.lane.b32.xlu0 %v1739, 17
    %v2005 = vpop.permute.xlu0 %2004
    %2006 = vrot.lane.b32.xlu0 %v1741, 17
    %v2007 = vpop.permute.xlu0 %2006
    %2008 = vrot.lane.b32.xlu0 %v1858, 17
    %v2009 = vpop.permute.xlu0 %2008
    %2010 = vrot.lane.b32.xlu0 %v1860, 17
    %v2011 = vpop.permute.xlu0 %2010
    %v2012 = vsel %vm132, %v2009, %v2011
    %v2013 = vsel %vm132, %v2007, %v2009
    %v2014 = vsel %vm132, %v2005, %v2007
    %v2015 = vsel %vm132, %v2003, %v2005
    %v2016 = vsel %vm132, %v2001, %v2003
    %v2017 = vsel %vm132, %v2011, %v2001
    %v2018 = vadd.f32 %v1994, %v2017
    %v2019 = vadd.f32 %v1995, %v2016
    %v2020 = vadd.f32 %v1996, %v2015
    %v2021 = vadd.f32 %v1997, %v2014
    %v2022 = vadd.f32 %v1998, %v2013
    %v2023 = vadd.f32 %v1999, %v2012
    %2024 = vrot.lane.b32.xlu0 %v1626, 18
    %v2025 = vpop.permute.xlu0 %2024
    %2026 = vrot.lane.b32.xlu0 %v1628, 18
    %v2027 = vpop.permute.xlu0 %2026
    %2028 = vrot.lane.b32.xlu0 %v1745, 18
    %v2029 = vpop.permute.xlu0 %2028
    %2030 = vrot.lane.b32.xlu0 %v1747, 18
    %v2031 = vpop.permute.xlu0 %2030
    %2032 = vrot.lane.b32.xlu0 %v1864, 18
    %v2033 = vpop.permute.xlu0 %2032
    %2034 = vrot.lane.b32.xlu0 %v1866, 18
    %v2035 = vpop.permute.xlu0 %2034
    %v2036 = vsel %vm89, %v2033, %v2035
    %v2037 = vsel %vm89, %v2031, %v2033
    %v2038 = vsel %vm89, %v2029, %v2031
    %v2039 = vsel %vm89, %v2027, %v2029
    %v2040 = vsel %vm89, %v2025, %v2027
    %v2041 = vsel %vm89, %v2035, %v2025
    %v2042 = vadd.f32 %v2018, %v2041
    %v2043 = vadd.f32 %v2019, %v2040
    %v2044 = vadd.f32 %v2020, %v2039
    %v2045 = vadd.f32 %v2021, %v2038
    %v2046 = vadd.f32 %v2022, %v2037
    %v2047 = vadd.f32 %v2023, %v2036
    %2048 = vrot.lane.b32.xlu0 %v1632, 19
    %v2049 = vpop.permute.xlu0 %2048
    %2050 = vrot.lane.b32.xlu0 %v1634, 19
    %v2051 = vpop.permute.xlu0 %2050
    %2052 = vrot.lane.b32.xlu0 %v1751, 19
    %v2053 = vpop.permute.xlu0 %2052
    %2054 = vrot.lane.b32.xlu0 %v1753, 19
    %v2055 = vpop.permute.xlu0 %2054
    %2056 = vrot.lane.b32.xlu0 %v1870, 19
    %v2057 = vpop.permute.xlu0 %2056
    %2058 = vrot.lane.b32.xlu0 %v1872, 19
    %v2059 = vpop.permute.xlu0 %2058
    %v2060 = vsel %vm64, %v2057, %v2059
    %v2061 = vsel %vm64, %v2055, %v2057
    %v2062 = vsel %vm64, %v2053, %v2055
    %v2063 = vsel %vm64, %v2051, %v2053
    %v2064 = vsel %vm64, %v2049, %v2051
    %v2065 = vsel %vm64, %v2059, %v2049
    %v2066 = vadd.f32 %v2042, %v2065
    %v2067 = vadd.f32 %v2043, %v2064
    %v2068 = vadd.f32 %v2044, %v2063
    %v2069 = vadd.f32 %v2045, %v2062
    %v2070 = vadd.f32 %v2046, %v2061
    %v2071 = vadd.f32 %v2047, %v2060
    %vm2072 = vcmp.gt.f32.partialorder %v457, 0.0
    %vm2073 = vcmp.gt.f32.partialorder %v459, 0.0
    %vm2074 = vcmp.gt.f32.partialorder %v528, 0.0
    %vm2075 = vcmp.gt.f32.partialorder %v530, 0.0
    %vm2076 = vcmp.gt.f32.partialorder %v599, 0.0
    %vm2077 = vcmp.gt.f32.partialorder %v601, 0.0
    %v2078 = vmul.f32 %v2066, %v613
    %v2079 = vmul.f32 %v2067, %v617
    %v2080 = vmul.f32 %v2068, %v621
    %v2081 = vmul.f32 %v2069, %v625
    %v2082 = vmul.f32 %v2070, %v629
    %v2083 = vmul.f32 %v2071, %v633
    %v2084 = vsel %vm2072, %v2078, 0.0
    %v2085 = vsel %vm2073, %v2079, 0.0
    %v2086 = vsel %vm2074, %v2080, 0.0
    %v2087 = vsel %vm2075, %v2081, 0.0
    %v2088 = vsel %vm2076, %v2082, 0.0
    %v2089 = vsel %vm2077, %v2083, 0.0
    %v2090 = vadd.f32 %v2084, %v2085
    %v2091 = vadd.f32 %v2090, %v2086
    %v2092 = vadd.f32 %v2091, %v2087
    %v2093 = vadd.f32 %v2092, %v2088
    %v2094 = vadd.f32 %v2093, %v2089
    %2095 = vadd.xlane.f32.xlu0 %v2094
    %v2096 = vpop.xlane.xlu0 %2095
    %vm2097 = vcmask 7168
    %2098 = vst.msk [vmem:[%s10] sm:$0xff] %vm2097, %v2096
    %v2099 = vld [vmem:[#allocation2] sm:$0xff]
    %v2100 = vld [vmem:[#allocation2 + $0x8] sm:$0xff]
    %v2101 = vld [vmem:[#allocation2 + $0x10] sm:$0xff]
    %v2102 = vld [vmem:[#allocation2 + $0x18] sm:$0xff]
    %v2103 = vld [vmem:[#allocation2 + $0x20] sm:$0xff]
    %v2104 = vld [vmem:[#allocation2 + $0x28] sm:$0xff]
    %v2105 = vld [vmem:[#allocation2 + $0x30] sm:$0xff]
    %v2106 = vld [vmem:[#allocation2 + $0x38] sm:$0xff]
    %v2107 = vld [vmem:[#allocation2 + $0x40] sm:$0xff]
    %v2108 = vld [vmem:[#allocation2 + $0x48] sm:$0xff]
    %v2109 = vld [vmem:[#allocation2 + $0x50] sm:$0xff]
    %v2110 = vld [vmem:[#allocation2 + $0x58] sm:$0xff]
    %v2111 = vld [vmem:[#allocation2 + $0x60] sm:$0xff]
    %v2112 = vld [vmem:[#allocation2 + $0x68] sm:$0xff]
    %v2113 = vld [vmem:[#allocation2 + $0x70] sm:$0xff]
    %v2114 = vld [vmem:[#allocation2 + $0x78] sm:$0xff]
    %v2115 = vld [vmem:[#allocation2 + $0x80] sm:$0xff]
    %v2116 = vld [vmem:[#allocation2 + $0x88] sm:$0xff]
    %v2117 = vld [vmem:[#allocation2 + $0x90] sm:$0xff]
    %v2118 = vld [vmem:[#allocation2 + $0x98] sm:$0xff]
    %v2119 = vld [vmem:[#allocation2 + $0xa0] sm:$0xff]
    %v2120 = vld [vmem:[#allocation2 + $0xa8] sm:$0xff]
    %v2121 = vld [vmem:[#allocation2 + $0xb0] sm:$0xff]
    %v2122 = vld [vmem:[#allocation2 + $0xb8] sm:$0xff]
    %v2123 = vld [vmem:[#allocation2 + $0xc0] sm:$0xf]
    %v2124 = vld [vmem:[#allocation2 + $0xc8] sm:$0xf]
    %v2125 = vld [vmem:[#allocation2 + $0xd0] sm:$0xf]
    %v2126 = vld [vmem:[#allocation2 + $0xd8] sm:$0xf]
    %v2127 = vld [vmem:[#allocation2 + $0xe0] sm:$0xf]
    %v2128 = vld [vmem:[#allocation2 + $0xe8] sm:$0xf]
    %2129 = vmatprep.subr.mxu0 0.0
    %2130 = vmatpush1.xpose.msra.mxu0 0.0
    %2131 = vmatprep.subr.mxu0 0.0
    %2132 = vmatpush1.xpose.msra.mxu0 0.0
    %2133 = vmatprep.subr.mxu0 0.0
    %2134 = vmatpush1.xpose.msra.mxu0 0.0
    %2135 = vmatprep.subr.mxu0 0.0
    %2136 = vmatpush1.xpose.msra.mxu0 0.0
    %2137 = vmatprep.subr.mxu0 0.0
    %2138 = vmatpush1.xpose.msra.mxu0 0.0
    %2139 = vmatprep.subr.mxu0 0.0
    %2140 = vmatpush1.xpose.msra.mxu0 0.0
    %2141 = vmatprep.subr.mxu0 0.0
    %2142 = vmatpush1.xpose.msra.mxu0 0.0
    %2143 = vmatprep.subr.mxu0 0.0
    %2144 = vmatpush1.xpose.msra.mxu0 0.0
    %2145 = vmatprep.subr.mxu0 0.0
    %2146 = vmatpush1.xpose.msra.mxu0 0.0
    %2147 = vmatprep.subr.mxu0 0.0
    %2148 = vmatpush1.xpose.msra.mxu0 0.0
    %2149 = vmatprep.subr.mxu0 0.0
    %2150 = vmatpush1.xpose.msra.mxu0 0.0
    %2151 = vmatprep.subr.mxu0 %v2124
    %2152 = vmatpush1.xpose.msra.mxu0 %v2123
    %2153 = vmatprep.subr.mxu0 %v2118
    %2154 = vmatpush1.xpose.msra.mxu0 %v2117
    %2155 = vmatprep.subr.mxu0 %v2112
    %2156 = vmatpush1.xpose.msra.mxu0 %v2111
    %2157 = vmatprep.subr.mxu0 %v2106
    %2158 = vmatpush1.xpose.msra.mxu0 %v2105
    %2159 = vmatprep.subr.mxu0 %v2100
    %2160 = vmatpush1.xpose.msra.mxu0 %v2099
    %2161 = vmatprep.subr.mxu0 0.0
    %2162 = vmatpush2.xpose.msra.mxu0 0.0
    %2163 = vmatprep.subr.mxu0 0.0
    %2164 = vmatpush2.xpose.msra.mxu0 0.0
    %2165 = vmatprep.subr.mxu0 0.0
    %2166 = vmatpush2.xpose.msra.mxu0 0.0
    %2167 = vmatprep.subr.mxu0 0.0
    %2168 = vmatpush2.xpose.msra.mxu0 0.0
    %2169 = vmatprep.subr.mxu0 0.0
    %2170 = vmatpush2.xpose.msra.mxu0 0.0
    %2171 = vmatprep.subr.mxu0 0.0
    %2172 = vmatpush2.xpose.msra.mxu0 0.0
    %2173 = vmatprep.subr.mxu0 0.0
    %2174 = vmatpush2.xpose.msra.mxu0 0.0
    %2175 = vmatprep.subr.mxu0 0.0
    %2176 = vmatpush2.xpose.msra.mxu0 0.0
    %2177 = vmatprep.subr.mxu0 0.0
    %2178 = vmatpush2.xpose.msra.mxu0 0.0
    %2179 = vmatprep.subr.mxu0 0.0
    %2180 = vmatpush2.xpose.msra.mxu0 0.0
    %2181 = vmatprep.subr.mxu0 0.0
    %2182 = vmatpush2.xpose.msra.mxu0 0.0
    %2183 = vmatprep.subr.mxu0 0.0
    %2184 = vmatpush2.xpose.msra.mxu0 0.0
    %2185 = vmatprep.subr.mxu0 0.0
    %2186 = vmatpush2.xpose.msra.mxu0 0.0
    %2187 = vmatprep.subr.mxu0 0.0
    %2188 = vmatpush2.xpose.msra.mxu0 0.0
    %2189 = vmatprep.subr.mxu0 0.0
    %2190 = vmatpush2.xpose.msra.mxu0 0.0
    %2191 = vmatprep.subr.mxu0 0.0
    %2192 = vmatpush2.xpose.msra.mxu0 0.0
    %2193 = vmatprep.mubr.f32.mxu0 %v2085
    %2194 = vmatmul.mubr.f32.gmra.mxu0 %v2084
    %v2195 = vpop.f32.mrf.mxu0
    %v2196 = vadd.f32 0.0, %v2195
    %v2197 = vpop.f32.mrf.mxu0
    %2198 = vdwg.mxu0
    %2199 = vmatprep.subr.mxu0 0.0
    %2200 = vmatpush1.xpose.msra.mxu0 0.0
    %2201 = vmatprep.subr.mxu0 0.0
    %2202 = vmatpush1.xpose.msra.mxu0 0.0
    %2203 = vmatprep.subr.mxu0 0.0
    %2204 = vmatpush1.xpose.msra.mxu0 0.0
    %2205 = vmatprep.subr.mxu0 0.0
    %2206 = vmatpush1.xpose.msra.mxu0 0.0
    %2207 = vmatprep.subr.mxu0 0.0
    %2208 = vmatpush1.xpose.msra.mxu0 0.0
    %2209 = vmatprep.subr.mxu0 0.0
    %2210 = vmatpush1.xpose.msra.mxu0 0.0
    %2211 = vmatprep.subr.mxu0 0.0
    %2212 = vmatpush1.xpose.msra.mxu0 0.0
    %2213 = vmatprep.subr.mxu0 0.0
    %2214 = vmatpush1.xpose.msra.mxu0 0.0
    %2215 = vmatprep.subr.mxu0 0.0
    %2216 = vmatpush1.xpose.msra.mxu0 0.0
    %2217 = vmatprep.subr.mxu0 0.0
    %2218 = vmatpush1.xpose.msra.mxu0 0.0
    %2219 = vmatprep.subr.mxu0 0.0
    %2220 = vmatpush1.xpose.msra.mxu0 0.0
    %2221 = vmatprep.subr.mxu0 %v2126
    %2222 = vmatpush1.xpose.msra.mxu0 %v2125
    %2223 = vmatprep.subr.mxu0 %v2120
    %2224 = vmatpush1.xpose.msra.mxu0 %v2119
    %2225 = vmatprep.subr.mxu0 %v2114
    %2226 = vmatpush1.xpose.msra.mxu0 %v2113
    %2227 = vmatprep.subr.mxu0 %v2108
    %2228 = vmatpush1.xpose.msra.mxu0 %v2107
    %2229 = vmatprep.subr.mxu0 %v2102
    %2230 = vmatpush1.xpose.msra.mxu0 %v2101
    %2231 = vmatprep.subr.mxu0 0.0
    %2232 = vmatpush2.xpose.msra.mxu0 0.0
    %2233 = vmatprep.subr.mxu0 0.0
    %2234 = vmatpush2.xpose.msra.mxu0 0.0
    %2235 = vmatprep.subr.mxu0 0.0
    %2236 = vmatpush2.xpose.msra.mxu0 0.0
    %2237 = vmatprep.subr.mxu0 0.0
    %2238 = vmatpush2.xpose.msra.mxu0 0.0
    %2239 = vmatprep.subr.mxu0 0.0
    %2240 = vmatpush2.xpose.msra.mxu0 0.0
    %2241 = vmatprep.subr.mxu0 0.0
    %2242 = vmatpush2.xpose.msra.mxu0 0.0
    %2243 = vmatprep.subr.mxu0 0.0
    %2244 = vmatpush2.xpose.msra.mxu0 0.0
    %2245 = vmatprep.subr.mxu0 0.0
    %2246 = vmatpush2.xpose.msra.mxu0 0.0
    %2247 = vmatprep.subr.mxu0 0.0
    %2248 = vmatpush2.xpose.msra.mxu0 0.0
    %2249 = vmatprep.subr.mxu0 0.0
    %2250 = vmatpush2.xpose.msra.mxu0 0.0
    %2251 = vmatprep.subr.mxu0 0.0
    %2252 = vmatpush2.xpose.msra.mxu0 0.0
    %2253 = vmatprep.subr.mxu0 0.0
    %2254 = vmatpush2.xpose.msra.mxu0 0.0
    %2255 = vmatprep.subr.mxu0 0.0
    %2256 = vmatpush2.xpose.msra.mxu0 0.0
    %2257 = vmatprep.subr.mxu0 0.0
    %2258 = vmatpush2.xpose.msra.mxu0 0.0
    %2259 = vmatprep.subr.mxu0 0.0
    %2260 = vmatpush2.xpose.msra.mxu0 0.0
    %2261 = vmatprep.subr.mxu0 0.0
    %2262 = vmatpush2.xpose.msra.mxu0 0.0
    %2263 = vmatprep.mubr.f32.mxu0 %v2087
    %2264 = vmatmul.mubr.f32.gmra.mxu0 %v2086
    %v2265 = vpop.f32.mrf.mxu0
    %v2266 = vadd.f32 %v2196, %v2265
    %v2267 = vpop.f32.mrf.mxu0
    %2268 = vdwg.mxu0
    %2269 = vmatprep.subr.mxu0 0.0
    %2270 = vmatpush1.xpose.msra.mxu0 0.0
    %2271 = vmatprep.subr.mxu0 0.0
    %2272 = vmatpush1.xpose.msra.mxu0 0.0
    %2273 = vmatprep.subr.mxu0 0.0
    %2274 = vmatpush1.xpose.msra.mxu0 0.0
    %2275 = vmatprep.subr.mxu0 0.0
    %2276 = vmatpush1.xpose.msra.mxu0 0.0
    %2277 = vmatprep.subr.mxu0 0.0
    %2278 = vmatpush1.xpose.msra.mxu0 0.0
    %2279 = vmatprep.subr.mxu0 0.0
    %2280 = vmatpush1.xpose.msra.mxu0 0.0
    %2281 = vmatprep.subr.mxu0 0.0
    %2282 = vmatpush1.xpose.msra.mxu0 0.0
    %2283 = vmatprep.subr.mxu0 0.0
    %2284 = vmatpush1.xpose.msra.mxu0 0.0
    %2285 = vmatprep.subr.mxu0 0.0
    %2286 = vmatpush1.xpose.msra.mxu0 0.0
    %2287 = vmatprep.subr.mxu0 0.0
    %2288 = vmatpush1.xpose.msra.mxu0 0.0
    %2289 = vmatprep.subr.mxu0 0.0
    %2290 = vmatpush1.xpose.msra.mxu0 0.0
    %2291 = vmatprep.subr.mxu0 %v2128
    %2292 = vmatpush1.xpose.msra.mxu0 %v2127
    %2293 = vmatprep.subr.mxu0 %v2122
    %2294 = vmatpush1.xpose.msra.mxu0 %v2121
    %2295 = vmatprep.subr.mxu0 %v2116
    %2296 = vmatpush1.xpose.msra.mxu0 %v2115
    %2297 = vmatprep.subr.mxu0 %v2110
    %2298 = vmatpush1.xpose.msra.mxu0 %v2109
    %2299 = vmatprep.subr.mxu0 %v2104
    %2300 = vmatpush1.xpose.msra.mxu0 %v2103
    %2301 = vmatprep.subr.mxu0 0.0
    %2302 = vmatpush2.xpose.msra.mxu0 0.0
    %2303 = vmatprep.subr.mxu0 0.0
    %2304 = vmatpush2.xpose.msra.mxu0 0.0
    %2305 = vmatprep.subr.mxu0 0.0
    %2306 = vmatpush2.xpose.msra.mxu0 0.0
    %2307 = vmatprep.subr.mxu0 0.0
    %2308 = vmatpush2.xpose.msra.mxu0 0.0
    %2309 = vmatprep.subr.mxu0 0.0
    %2310 = vmatpush2.xpose.msra.mxu0 0.0
    %2311 = vmatprep.subr.mxu0 0.0
    %2312 = vmatpush2.xpose.msra.mxu0 0.0
    %2313 = vmatprep.subr.mxu0 0.0
    %2314 = vmatpush2.xpose.msra.mxu0 0.0
    %2315 = vmatprep.subr.mxu0 0.0
    %2316 = vmatpush2.xpose.msra.mxu0 0.0
    %2317 = vmatprep.subr.mxu0 0.0
    %2318 = vmatpush2.xpose.msra.mxu0 0.0
    %2319 = vmatprep.subr.mxu0 0.0
    %2320 = vmatpush2.xpose.msra.mxu0 0.0
    %2321 = vmatprep.subr.mxu0 0.0
    %2322 = vmatpush2.xpose.msra.mxu0 0.0
    %2323 = vmatprep.subr.mxu0 0.0
    %2324 = vmatpush2.xpose.msra.mxu0 0.0
    %2325 = vmatprep.subr.mxu0 0.0
    %2326 = vmatpush2.xpose.msra.mxu0 0.0
    %2327 = vmatprep.subr.mxu0 0.0
    %2328 = vmatpush2.xpose.msra.mxu0 0.0
    %2329 = vmatprep.subr.mxu0 0.0
    %2330 = vmatpush2.xpose.msra.mxu0 0.0
    %2331 = vmatprep.subr.mxu0 0.0
    %2332 = vmatpush2.xpose.msra.mxu0 0.0
    %2333 = vmatprep.mubr.f32.mxu0 %v2089
    %2334 = vmatmul.mubr.f32.gmra.mxu0 %v2088
    %v2335 = vpop.f32.mrf.mxu0
    %v2336 = vadd.f32 %v2266, %v2335
    %v2337 = vpop.f32.mrf.mxu0
    %2338 = vdwg.mxu0
    %2339 = vst.msk [vmem:[#allocation7] sm:$0xff] %vm367, %v2336
    // Predicated region
    $region34: #{tpu_custom_call.1} parent=1 // pred_check
      _
    $region35: #{tpu_custom_call.1} parent=1 // pred_check_branch
      %2341 = sbr.rel (0) target = $region37
    $region36: #{tpu_custom_call.1} parent=1 // pred_region
      %s2343 = ssub.s32 16, 16
      %2344 = vsyncadd [#allocation6], %s2343
      %2347 = dma.smem_to_hbm [#allocation4], 16, %s8, [#allocation6]
    $region37: #{tpu_custom_call.1} parent=1 // pred_fallthru
      _
    // Predicated region
    $region38: #{tpu_custom_call.1} parent=1 // pred_check
      _
    $region39: #{tpu_custom_call.1} parent=1 // pred_check_branch
      %2349 = sbr.rel (0) target = $region41
    $region40: #{tpu_custom_call.1} parent=1 // pred_region
      %s2351 = ssub.s32 128, 128
      %2352 = vsyncadd [#allocation5], %s2351
      %s2354 = sshll.u32 [#allocation7], 4
      %s2355 = int_to_ptr.vmem [resolvable:$true] %s2354
      %2357 = dma.vmem_to_hbm [thread:$0]  %s2355, 128, %s9, [#allocation5]
    $region41: #{tpu_custom_call.1} parent=1 // pred_fallthru
      _
    // Predicated region
    $region42: #{tpu_custom_call.1} parent=1 // pred_check
      _
    $region43: #{tpu_custom_call.1} parent=1 // pred_check_branch
      %2359 = sbr.rel (0) target = $region45
    $region44: #{tpu_custom_call.1} parent=1 // pred_region
      _
    $region45: #{tpu_custom_call.1} parent=1 // pred_fallthru
      _
    // Predicated region
    $region46: #{tpu_custom_call.1} parent=1 // pred_check
      _
    $region47: #{tpu_custom_call.1} parent=1 // pred_check_branch
      %2361 = sbr.rel (0) target = $region49
    $region48: #{tpu_custom_call.1} parent=1 // pred_region
      %s2363 = ssub.s32 64, 64
      %2364 = vsyncadd [#allocation9], %s2363
      %s2366 = sshll.u32 [#allocation8], 4
      %s2367 = int_to_ptr.vmem [resolvable:$true] %s2366
      %2369 = dma.vmem_to_hbm [thread:$0]  %s2367, 64, %s11, [#allocation9]
    $region49: #{tpu_custom_call.1} parent=1 // pred_fallthru
      _
    // Predicated region
    $region50: #{tpu_custom_call.1} parent=1 // pred_check
      _
    $region51: #{tpu_custom_call.1} parent=1 // pred_check_branch
      %2371 = sbr.rel (0) target = $region53
    $region52: #{tpu_custom_call.1} parent=1 // pred_region
      _
    $region53: #{tpu_custom_call.1} parent=1 // pred_fallthru
      _
    // Predicated region
    $region54: #{tpu_custom_call.1} parent=1 // pred_check
      _
    $region55: #{tpu_custom_call.1} parent=1 // pred_check_branch
      %2373 = sbr.rel (0) target = $region57
    $region56: #{tpu_custom_call.1} parent=1 // pred_region
      %2374 = dma.done [#allocation6], 16
    $region57: #{tpu_custom_call.1} parent=1 // pred_fallthru
      _
    // Predicated region
    $region58: #{tpu_custom_call.1} parent=1 // pred_check
      _
    $region59: #{tpu_custom_call.1} parent=1 // pred_check_branch
      %2376 = sbr.rel (0) target = $region61
    $region60: #{tpu_custom_call.1} parent=1 // pred_region
      %2377 = dma.done [#allocation5], 128
    $region61: #{tpu_custom_call.1} parent=1 // pred_fallthru
      _
    // Predicated region
    $region62: #{tpu_custom_call.1} parent=1 // pred_check
      _
    $region63: #{tpu_custom_call.1} parent=1 // pred_check_branch
      %2379 = sbr.rel (0) target = $region65
    $region64: #{tpu_custom_call.1} parent=1 // pred_region
      _
    $region65: #{tpu_custom_call.1} parent=1 // pred_fallthru
      _
    // Predicated region
    $region66: #{tpu_custom_call.1} parent=1 // pred_check
      _
    $region67: #{tpu_custom_call.1} parent=1 // pred_check_branch
      %2381 = sbr.rel (0) target = $region69
    $region68: #{tpu_custom_call.1} parent=1 // pred_region
      %2382 = dma.done [#allocation9], 64
    $region69: #{tpu_custom_call.1} parent=1 // pred_fallthru
      _
    // Predicated region
    $region70: #{tpu_custom_call.1} parent=1 // pred_check
      _
    $region71: #{tpu_custom_call.1} parent=1 // pred_check_branch
      %2384 = sbr.rel (0) target = $region73
    $region72: #{tpu_custom_call.1} parent=1 // pred_region
      _
    $region73: #{tpu_custom_call.1} parent=1 // pred_fallthru
      _
    %2385 = sfence
    %2386 = vsyncpa [#allocation5], 1
    %2387 = vsyncpa [#allocation9], 1
    %2388 = vsyncpa [#allocation6], 1

</llo_original>
